<compile_context>
chip_gen: v6e
topology: v6e:2x2x1
jax: 0.10.0
libtpu: 0.0.40
codegen_flags: <defaults>
</compile_context>

<pallas_src>
import functools

import jax
import jax.numpy as jnp
from jax.experimental import pallas as pl
from jax.experimental.pallas import tpu as pltpu


# ------------------------------ helpers ------------------------------------

def _round_up(n, m):
    return ((n + m - 1) // m) * m


def _tile(n, prefs=(1024, 512, 256, 128)):
    """Largest lane/sublane-friendly tile (multiple of 128) dividing n, else full extent."""
    for t in prefs:
        if n >= t and n % t == 0:
            return t
    return n


def _pad_axis_to(a, axis, size):
    if a.shape[axis] == size:
        return a
    pads = [(0, 0)] * a.ndim
    pads[axis] = (0, size - a.shape[axis])
    return jnp.pad(a, pads)


def _vmem_limit_bytes():
    # Generation-aware budget: ~3/4 of physical VMEM, capped at 96 MiB (v6e/v5e: 128 MiB
    # physical; v7x: 64 MiB physical -> 48 MiB budget).
    try:
        cap = pltpu.get_tpu_info().vmem_capacity_bytes
        return int(min(cap * 3 // 4, 96 * 1024 * 1024))
    except Exception:
        return 48 * 1024 * 1024


def _compiler_params():
    return pltpu.CompilerParams(
        dimension_semantics=("parallel", "parallel"),
        vmem_limit_bytes=_vmem_limit_bytes(),
    )


# ----------------------------- Pallas kernels -------------------------------

def _scores_kernel(x_ref, wn_ref, o_ref):
    # x_ref : (1, TP, Kp) bf16 im2col rows of the foreground (K zero-padded to 128).
    # wn_ref: (1, Kp, L)  bf16 L2-normalized background patches (precomputed per batch).
    o_ref[0] = jnp.dot(x_ref[0], wn_ref[0],
                       preferred_element_type=jnp.float32).astype(o_ref.dtype)


def _attention_recon_kernel(s_ref, mm_ref, rw_ref, cols_ref, idx_ref, *, scale):
    # s_ref : (1, TP, L) bf16 fused scores; mm_ref: (1, L) f32 valid-patch mask;
    # rw_ref: (1, L, C16p) bf16 raw 4x4 patches.  Softmax/argmax reduce over lanes (L).
    mm = mm_ref[...]                                      # (1, L)
    s = s_ref[0].astype(jnp.float32) * mm * scale         # (TP, L), f32
    m = jnp.max(s, axis=1, keepdims=True)
    e = jnp.exp(s - m)
    w = e * mm                                            # masked numerators
    # argmax over the patch axis from w (invariant to the positive per-row denominator);
    # first-occurrence tie break via where/iota/min.
    amax = jnp.max(w, axis=1, keepdims=True)
    iota = jax.lax.broadcasted_iota(jnp.int32, w.shape, 1)
    L = w.shape[1]
    idx_ref[0] = jnp.min(jnp.where(w >= amax, iota, L), axis=1, keepdims=True)
    denom = jnp.sum(e, axis=1, keepdims=True)             # reference sums exp over ALL L
    att = (w * pl.reciprocal(denom, approx=True)).astype(jnp.bfloat16)
    # reconstruction (att stays in VMEM); conv_transpose's /4.0 folded in here.
    acc = jnp.dot(att, rw_ref[0], preferred_element_type=jnp.float32)
    cols_ref[0] = (acc * 0.25).astype(cols_ref.dtype)


def _conv_bias_elu_kernel(w_ref, x_ref, b_ref, o_ref):
    y = jnp.dot(w_ref[...], x_ref[0], preferred_element_type=jnp.float32) + b_ref[...]
    # ELU(alpha=1); clamp the exp argument so the discarded branch cannot overflow.
    o_ref[0] = jnp.where(y > 0, y, jnp.exp(jnp.minimum(y, 0.0)) - 1.0).astype(o_ref.dtype)


# ----------------------------- Pallas wrappers -------------------------------

def pallas_scores(x_cols, wn_t):
    B, P, Kp = x_cols.shape
    _, _, L = wn_t.shape
    TP = _tile(P)
    return pl.pallas_call(
        _scores_kernel,
        out_shape=jax.ShapeDtypeStruct((B, P, L), jnp.bfloat16),
        grid_spec=pltpu.PrefetchScalarGridSpec(
            num_scalar_prefetch=0,
            grid=(B, P // TP),
            in_specs=[pl.BlockSpec((1, TP, Kp), lambda b, j: (b, j, 0)),
                      pl.BlockSpec((1, Kp, L), lambda b, j: (b, 0, 0))],
            out_specs=pl.BlockSpec((1, TP, L), lambda b, j: (b, j, 0))),
        compiler_params=_compiler_params(),
    )(x_cols, wn_t)


def pallas_attention_recon(scores, mm, raw_w, scale):
    # TODO(synk): for very large L on v7x, add an L reduction axis with a VMEM f32
    # accumulator instead of keeping the full-L raw_w block resident.
    B, P, L = scores.shape
    _, _, C16p = raw_w.shape
    TP = _tile(P)
    return pl.pallas_call(
        functools.partial(_attention_recon_kernel, scale=scale),
        out_shape=(jax.ShapeDtypeStruct((B, P, C16p), jnp.bfloat16),
                   jax.ShapeDtypeStruct((B, P, 1), jnp.int32)),
        grid_spec=pltpu.PrefetchScalarGridSpec(
            num_scalar_prefetch=0,
            grid=(B, P // TP),
            in_specs=[pl.BlockSpec((1, TP, L), lambda b, j: (b, j, 0)),
                      pl.BlockSpec((1, L), lambda b, j: (0, 0)),
                      pl.BlockSpec((1, L, C16p), lambda b, j: (b, 0, 0))],
            out_specs=(pl.BlockSpec((1, TP, C16p), lambda b, j: (b, j, 0)),
                       pl.BlockSpec((1, TP, 1), lambda b, j: (b, j, 0)))),
        compiler_params=_compiler_params(),
    )(scores, mm, raw_w)


def pallas_conv_bias_elu(w, x, bias, out_dtype):
    # w: (Cout, Kp) bf16, x: (B, Kp, N) bf16 im2col (K zero-padded), bias: (Cout, 1) f32.
    Cout, Kp = w.shape
    B, _, N = x.shape
    TN = _tile(N)
    return pl.pallas_call(
        _conv_bias_elu_kernel,
        out_shape=jax.ShapeDtypeStruct((B, Cout, N), out_dtype),
        grid_spec=pltpu.PrefetchScalarGridSpec(
            num_scalar_prefetch=0,
            grid=(B, N // TN),
            in_specs=[pl.BlockSpec((Cout, Kp), lambda b, j: (0, 0)),
                      pl.BlockSpec((1, Kp, TN), lambda b, j: (b, 0, j)),
                      pl.BlockSpec((Cout, 1), lambda b, j: (0, 0))],
            out_specs=pl.BlockSpec((1, Cout, TN), lambda b, j: (b, 0, j))),
        compiler_params=_compiler_params(),
    )(w, x, bias)


# ------------------------------- JAX glue ------------------------------------

def extract_patches(x, kernel=3, stride=1):
    # x: (B, C, H, W). Matches module: ZeroPad2d(1) then unfold(2,k,s).unfold(3,k,s).
    B, C, H, W = x.shape
    xp = jnp.pad(x, ((0, 0), (0, 0), (1, 1), (1, 1)))
    Hout = (H + 2 - kernel) // stride + 1
    Wout = (W + 2 - kernel) // stride + 1
    rows = []
    for kh in range(kernel):
        cols = []
        for kw in range(kernel):
            cols.append(xp[:, :, kh:kh + stride * Hout:stride, kw:kw + stride * Wout:stride])
        rows.append(jnp.stack(cols, axis=-1))
    return jnp.stack(rows, axis=-2)  # (B, C, Hout, Wout, k, k)


def down_sample_nearest(x, rate):
    # Reference down_sample(mode='nearest') = F.max_pool2d(kernel=stride=rate).
    B, C, H, W = x.shape
    return x.reshape(B, C, H // rate, rate, W // rate, rate).max(axis=(3, 5))


def _fuse_eye3(x):
    # F.conv2d with eye(3) kernel, padding=1, batched over the leading axis:
    # out[i, j] = x[i-1, j-1] + x[i, j] + x[i+1, j+1]   (zero outside)
    xp = jnp.pad(x, ((0, 0), (1, 1), (1, 1)))
    return xp[:, :-2, :-2] + xp[:, 1:-1, 1:-1] + xp[:, 2:, 2:]


def col2im_4x4_stride2(cols, H, W):
    # Single-pass col2im for conv_transpose2d(kernel=4, stride=2, padding=1):
    # each output pixel receives exactly 4 contributions -> 4 parity planes, interleaved.
    B, Hf, Wf, C = cols.shape[:4]
    planes = []
    for p in range(2):
        row = []
        for q in range(2):
            t00 = cols[:, :, :, :, p, q]
            t20 = cols[:, :, :, :, p + 2, q]
            t02 = cols[:, :, :, :, p, q + 2]
            t22 = cols[:, :, :, :, p + 2, q + 2]
            plane = (jnp.pad(t00, ((0, 0), (0, 1), (0, 1), (0, 0)))
                     + jnp.pad(t20, ((0, 0), (1, 0), (0, 1), (0, 0)))
                     + jnp.pad(t02, ((0, 0), (0, 1), (1, 0), (0, 0)))
                     + jnp.pad(t22, ((0, 0), (1, 0), (1, 0), (0, 0))))   # (B, Hf+1, Wf+1, C)
            row.append(plane)
        planes.append(row)
    pq = jnp.stack([jnp.stack(row, axis=0) for row in planes], axis=0)   # (2, 2, B, Hf+1, Wf+1, C)
    pq = pq.transpose(2, 3, 0, 4, 1, 5)                                  # (B, Hf+1, 2, Wf+1, 2, C)
    out_pad = pq.reshape(B, 2 * (Hf + 1), 2 * (Wf + 1), C)               # (B, H+2, W+2, C)
    return out_pad[:, 1:1 + H, 1:1 + W, :].transpose(0, 3, 1, 2)          # (B, C, H, W)


@functools.partial(jax.jit, static_argnames=("rate", "ksize", "softmax_scale"))
def contextual_attention_forward(f, b, mask, params, rate=2, ksize=3, softmax_scale=10.0):
    B, C, H, W = f.shape
    kernel = 2 * rate
    Hb, Wb = H // rate, W // rate
    Hf, Wf = H // rate, W // rate
    L = Hb * Wb                      # number of background patches
    P = Hf * Wf                      # number of foreground positions
    K = C * ksize * ksize
    Kp = _round_up(K, 128)           # lane-aligned contraction dim
    C16 = C * kernel * kernel
    C16p = _round_up(C16, 128)       # lane-aligned raw-patch width

    # raw 4x4 patches from full-resolution b (for the transposed-conv reconstruction)
    raw_p = extract_patches(b, kernel=kernel, stride=rate)               # (B, C, Hb, Wb, 4, 4)
    raw_w = raw_p.transpose(0, 2, 3, 1, 4, 5).reshape(B, L, C16)
    raw_w = _pad_axis_to(raw_w.astype(jnp.bfloat16), 2, C16p)            # (B, L, C16p)

    # downsample f, b, mask by rate
    f_ds = down_sample_nearest(f, rate)
    b_ds = down_sample_nearest(b, rate)
    mask_ds = down_sample_nearest(mask, rate) if mask.shape[2] != b_ds.shape[2] else mask

    # 3x3 matching patches from downsampled b; L2-normalize once, K-pad, present as (Kp, L)
    wp = extract_patches(b_ds, kernel=ksize, stride=1)                   # (B, C, Hb, Wb, 3, 3)
    w_flat = wp.transpose(0, 2, 3, 1, 4, 5).reshape(B, L, K)
    norm = jnp.sqrt(jnp.sum(w_flat * w_flat, axis=-1, keepdims=True))    # l2_norm per patch
    wn = (w_flat / jnp.maximum(norm, 1e-4)).astype(jnp.bfloat16)         # escape_NaN = 1e-4
    wn_t = jnp.swapaxes(_pad_axis_to(wn, 2, Kp), 1, 2)                   # (B, Kp, L)

    # mm: valid-patch indicator from the mask (batch 0 only, as in the reference: m = m[0])
    mp = extract_patches(mask_ds[0:1], kernel=ksize, stride=1)           # (1, 1, Hb, Wb, 3, 3)
    mmean = jnp.mean(mp, axis=(1, 4, 5)).reshape(L)
    mm = (mmean == 0.0).astype(jnp.float32).reshape(1, L)

    # im2col of the downsampled foreground, P-major -> (B, P, Kp)
    xp = extract_patches(f_ds, kernel=ksize, stride=1)                   # (B, C, Hf, Wf, 3, 3)
    x_cols = xp.transpose(0, 2, 3, 1, 4, 5).reshape(B, P, K)
    x_cols = _pad_axis_to(x_cols.astype(jnp.bfloat16), 2, Kp)

    # correlation scores on the MXU (tiled over batch and P, bf16 out)
    scores = pallas_scores(x_cols, wn_t)                                 # (B, P, L) bf16

    # fuse: two eye(3) convolutions over the (P, L) matrix with the reference's exact
    # permute/view shuffles (kept in bf16).
    # TODO(synk): folding the fuse into the Pallas pipeline needs a +-1 halo on the P tile
    # plus the global (Hf,Wf)<->(Wf,Hf) permute between the two passes; kept in XLA.
    A = _fuse_eye3(scores)                                               # (B, P, L)
    A = A.reshape(B, Hf, Wf, Hb, Wb).transpose(0, 2, 1, 4, 3).reshape(B, Wf * Hf, Wb * Hb)
    A = _fuse_eye3(A)
    scores_fused = A.reshape(B, Wf, Hf, Wb, Hb).transpose(0, 2, 1, 4, 3).reshape(B, P, L)

    # fused masked softmax + argmax + patch reconstruction (att never leaves VMEM)
    cols, idx = pallas_attention_recon(scores_fused, mm, raw_w, softmax_scale)

    # offsets (row = idx // Wf, col = idx % Wf)
    # TODO(synk): the reference's literal `torch.div(offset, fs[3]) - division` degenerates
    # under old integer division; the intended (floordiv, mod) semantics are used here.
    idx = idx.reshape(B, P)
    off = jnp.stack([idx // Wf, idx % Wf], axis=-1)                      # (B, P, 2)
    offsets = off.reshape(B, Hf, Wf, 2).astype(jnp.int32)
    # mirrors the reference's literal .view((B, 2, Hb, Wb))
    offsets = offsets.reshape(B, 2, Hb, Wb)
    h_add = jnp.broadcast_to(jnp.arange(Hb, dtype=jnp.int32).reshape(1, 1, Hb, 1), (B, 1, Hb, Wb))
    w_add = jnp.broadcast_to(jnp.arange(Wb, dtype=jnp.int32).reshape(1, 1, 1, Wb), (B, 1, Hb, Wb))
    offsets = offsets - jnp.concatenate([h_add, w_add], axis=1)

    # reconstruction writeback: conv_transpose2d(att, raw_patches, stride=rate, padding=1) / 4
    # (the /4 is already folded into the recon kernel); single-pass parity-interleave col2im.
    cols = cols[:, :, :C16].reshape(B, Hf, Wf, C, kernel, kernel)        # bf16
    y = col2im_4x4_stride2(cols, H, W)                                   # (B, C, H, W) bf16

    # self.out: two (Conv2d 3x3, pad=1) + ELU layers via im2col + Pallas matmul kernel.
    # TODO(synk): replace host-side im2col with an in-kernel halo-tile conv to cut the
    # 9x-expanded activation HBM traffic further.
    w1, b1, w2, b2 = params
    out_ch = w1.shape[0]
    Kp2 = _round_up(out_ch * 9, 128)
    w1f = _pad_axis_to(w1.reshape(out_ch, C * 9).astype(jnp.bfloat16), 1, Kp)
    w2f = _pad_axis_to(w2.reshape(out_ch, out_ch * 9).astype(jnp.bfloat16), 1, Kp2)

    N = H * W
    xc = extract_patches(y, 3, 1).transpose(0, 1, 4, 5, 2, 3).reshape(B, C * 9, N)
    xc = _pad_axis_to(xc, 1, Kp)
    h1 = pallas_conv_bias_elu(w1f, xc, b1.reshape(out_ch, 1), jnp.bfloat16)
    h1 = h1.reshape(B, out_ch, H, W)
    xc2 = extract_patches(h1, 3, 1).transpose(0, 1, 4, 5, 2, 3).reshape(B, out_ch * 9, N)
    xc2 = _pad_axis_to(xc2, 1, Kp2)
    h2 = pallas_conv_bias_elu(w2f, xc2, b2.reshape(out_ch, 1), jnp.float32)
    y_out = h2.reshape(B, out_ch, H, W)

    return y_out, offsets


def init_params(key, in_ch, out_ch):
    # Kaiming-normal (fan_in, a=0) weights, zero bias — matches weights_init('kaiming')
    k1, k2 = jax.random.split(key)
    std1 = (2.0 / (in_ch * 9)) ** 0.5
    std2 = (2.0 / (out_ch * 9)) ** 0.5
    w1 = std1 * jax.random.normal(k1, (out_ch, in_ch, 3, 3), jnp.float32)
    w2 = std2 * jax.random.normal(k2, (out_ch, out_ch, 3, 3), jnp.float32)
    b1 = jnp.zeros((out_ch,), jnp.float32)
    b2 = jnp.zeros((out_ch,), jnp.float32)
    return (w1, b1, w2, b2)


if __name__ == "__main__":
    key = jax.random.PRNGKey(0)
    kf, kb, kp = jax.random.split(key, 3)
    B, C, H, W = 2, 4, 16, 16
    f = jax.random.normal(kf, (B, C, H, W), jnp.float32)
    b = jax.random.normal(kb, (B, C, H, W), jnp.float32)
    mask = jnp.zeros((B, 1, H, W), jnp.float32).at[:, :, 4:12, 4:12].set(1.0)
    params = init_params(kp, C, C)

    y, offsets = contextual_attention_forward(f, b, mask, params, rate=2)
    jax.block_until_ready((y, offsets))

    assert y.shape == (B, C, H, W), y.shape
    assert offsets.shape == (B, 2, H // 2, W // 2), offsets.shape
    assert y.dtype == jnp.float32 and offsets.dtype == jnp.int32
    assert bool(jnp.all(jnp.isfinite(y)))
    print("KERNEL_OK")
</pallas_src>

<mosaic_0001>
module attributes {stable_mosaic.version = 11 : i64} {
  func.func @_scores_kernel(%arg0: i32, %arg1: i32, %arg2: memref<1x64x128xbf16, #tpu.memory_space<vmem>>, %arg3: memref<1x128x64xbf16, #tpu.memory_space<vmem>>, %arg4: memref<1x64x64xbf16, #tpu.memory_space<vmem>>) attributes {dimension_semantics = [#tpu.dimension_semantics<parallel>, #tpu.dimension_semantics<parallel>], iteration_bounds = array<i64: 2, 1>, scalar_prefetch = 0 : i64, scratch_operands = 0 : i64, tpu.core_type = #tpu.core_type<tc>, window_params = [{transform_indices = @transform_0, window_bounds = array<i64: 1, 64, 128>}, {transform_indices = @transform_1, window_bounds = array<i64: 1, 128, 64>}, {transform_indices = @transform_2, window_bounds = array<i64: 1, 64, 64>}]} {
    %c0 = arith.constant 0 : index
    %c0_0 = arith.constant 0 : index
    %c0_1 = arith.constant 0 : index
    %0 = vector.load %arg2[%c0, %c0_0, %c0_1] : memref<1x64x128xbf16, #tpu.memory_space<vmem>>, vector<1x64x128xbf16>
    %1 = vector.shape_cast %0 : vector<1x64x128xbf16> to vector<64x128xbf16>
    %c0_2 = arith.constant 0 : index
    %c0_3 = arith.constant 0 : index
    %c0_4 = arith.constant 0 : index
    %2 = vector.load %arg3[%c0_2, %c0_3, %c0_4] : memref<1x128x64xbf16, #tpu.memory_space<vmem>>, vector<1x128x64xbf16>
    %3 = vector.shape_cast %2 : vector<1x128x64xbf16> to vector<128x64xbf16>
    %cst = arith.constant dense<0.000000e+00> : vector<64x64xf32>
    %4 = tpu.matmul %1, %3, %cst {dimension_numbers = #tpu.dot_dimension_numbers<[1], [0], [0], [1], [0, 0, 1, 1], [], []>} : vector<64x128xbf16>, vector<128x64xbf16>, vector<64x64xf32> -> vector<64x64xf32>
    %5 = arith.truncf %4 : vector<64x64xf32> to vector<64x64xbf16>
    %c0_5 = arith.constant 0 : index
    %c0_6 = arith.constant 0 : index
    %c0_7 = arith.constant 0 : index
    %6 = vector.load %arg4[%c0_5, %c0_6, %c0_7] : memref<1x64x64xbf16, #tpu.memory_space<vmem>>, vector<1x64x64xbf16>
    %7 = vector.shape_cast %6 : vector<1x64x64xbf16> to vector<64x64xbf16>
    %8 = vector.shape_cast %5 : vector<64x64xbf16> to vector<1x64x64xbf16>
    tpu.vector_store %arg4[%c0_5, %c0_6, %c0_7], %8 {strides = array<i32>} : memref<1x64x64xbf16, #tpu.memory_space<vmem>>, vector<1x64x64xbf16>,
    return
  }
  func.func @transform_0(%arg0: i32, %arg1: i32) -> (i32, i32, i32) {
    %c0_i32 = arith.constant 0 : i32
    %c0_i32_0 = arith.constant 0 : i32
    return %arg0, %arg1, %c0_i32 : i32, i32, i32
  }
  func.func @transform_1(%arg0: i32, %arg1: i32) -> (i32, i32, i32) {
    %c0_i32 = arith.constant 0 : i32
    %c0_i32_0 = arith.constant 0 : i32
    %c0_i32_1 = arith.constant 0 : i32
    return %arg0, %c0_i32, %c0_i32_0 : i32, i32, i32
  }
  func.func @transform_2(%arg0: i32, %arg1: i32) -> (i32, i32, i32) {
    %c0_i32 = arith.constant 0 : i32
    %c0_i32_0 = arith.constant 0 : i32
    return %arg0, %arg1, %c0_i32 : i32, i32, i32
  }
}

module attributes {stable_mosaic.version = 11 : i64} {
  func.func @_attention_recon_kernel(%arg0: i32, %arg1: i32, %arg2: memref<1x64x64xbf16, #tpu.memory_space<vmem>>, %arg3: memref<1x64xf32, #tpu.memory_space<vmem>>, %arg4: memref<1x64x128xbf16, #tpu.memory_space<vmem>>, %arg5: memref<1x64x128xbf16, #tpu.memory_space<vmem>>, %arg6: memref<1x64x1xi32, #tpu.memory_space<vmem>>) attributes {dimension_semantics = [#tpu.dimension_semantics<parallel>, #tpu.dimension_semantics<parallel>], iteration_bounds = array<i64: 2, 1>, scalar_prefetch = 0 : i64, scratch_operands = 0 : i64, tpu.core_type = #tpu.core_type<tc>, window_params = [{transform_indices = @transform_0, window_bounds = array<i64: 1, 64, 64>}, {pipeline_mode = #tpu.pipeline_mode<synchronous>, transform_indices = @transform_1, window_bounds = array<i64: 1, 64>}, {transform_indices = @transform_2, window_bounds = array<i64: 1, 64, 128>}, {transform_indices = @transform_3, window_bounds = array<i64: 1, 64, 128>}, {transform_indices = @transform_4, window_bounds = array<i64: 1, 64, 1>}]} {
    %c0 = arith.constant 0 : index
    %c0_0 = arith.constant 0 : index
    %0 = vector.load %arg3[%c0, %c0_0] : memref<1x64xf32, #tpu.memory_space<vmem>>, vector<1x64xf32>
    %c0_1 = arith.constant 0 : index
    %c0_2 = arith.constant 0 : index
    %c0_3 = arith.constant 0 : index
    %1 = vector.load %arg2[%c0_1, %c0_2, %c0_3] : memref<1x64x64xbf16, #tpu.memory_space<vmem>>, vector<1x64x64xbf16>
    %2 = vector.shape_cast %1 : vector<1x64x64xbf16> to vector<64x64xbf16>
    %3 = arith.extf %2 : vector<64x64xbf16> to vector<64x64xf32>
    %4 = vector.broadcast %0 : vector<1x64xf32> to vector<64x64xf32>
    %5 = arith.mulf %3, %4 : vector<64x64xf32>
    %cst = arith.constant 1.000000e+01 : f32
    %6 = vector.broadcast %cst : f32 to vector<64x64xf32>
    %7 = arith.mulf %5, %6 : vector<64x64xf32>
    %cst_4 = arith.constant dense<0xFF800000> : vector<64xf32>
    %8 = vector.multi_reduction <maximumf>, %7, %cst_4 [1] : vector<64x64xf32> to vector<64xf32>
    %9 = vector.shape_cast %8 : vector<64xf32> to vector<64x1xf32>
    %10 = vector.broadcast %9 : vector<64x1xf32> to vector<64x64xf32>
    %11 = arith.subf %7, %10 : vector<64x64xf32>
    %12 = math.exp %11 : vector<64x64xf32>
    %13 = vector.broadcast %0 : vector<1x64xf32> to vector<64x64xf32>
    %14 = arith.mulf %12, %13 : vector<64x64xf32>
    %cst_5 = arith.constant dense<0xFF800000> : vector<64xf32>
    %15 = vector.multi_reduction <maximumf>, %14, %cst_5 [1] : vector<64x64xf32> to vector<64xf32>
    %16 = vector.shape_cast %15 : vector<64xf32> to vector<64x1xf32>
    %17 = tpu.iota {dimensions = array<i32: 1>} : vector<64x64xi32>
    %18 = vector.broadcast %16 : vector<64x1xf32> to vector<64x64xf32>
    %19 = arith.cmpf oge, %14, %18 : vector<64x64xf32>
    %c64_i32 = arith.constant 64 : i32
    %20 = vector.broadcast %c64_i32 : i32 to vector<64x64xi32>
    %21 = arith.select %19, %17, %20 : vector<64x64xi1>, vector<64x64xi32>
    %cst_6 = arith.constant dense<2147483647> : vector<64xi32>
    %22 = vector.multi_reduction <minsi>, %21, %cst_6 [1] : vector<64x64xi32> to vector<64xi32>
    %23 = vector.shape_cast %22 : vector<64xi32> to vector<64x1xi32>
    %c0_7 = arith.constant 0 : index
    %c0_8 = arith.constant 0 : index
    %c0_9 = arith.constant 0 : index
    %24 = vector.load %arg6[%c0_7, %c0_8, %c0_9] : memref<1x64x1xi32, #tpu.memory_space<vmem>>, vector<1x64x1xi32>
    %25 = vector.shape_cast %24 : vector<1x64x1xi32> to vector<64x1xi32>
    %26 = vector.shape_cast %23 : vector<64x1xi32> to vector<1x64x1xi32>
    tpu.vector_store %arg6[%c0_7, %c0_8, %c0_9], %26 {strides = array<i32>} : memref<1x64x1xi32, #tpu.memory_space<vmem>>, vector<1x64x1xi32>,
    %cst_10 = arith.constant dense<0.000000e+00> : vector<64xf32>
    %27 = vector.multi_reduction <add>, %12, %cst_10 [1] : vector<64x64xf32> to vector<64xf32>
    %28 = vector.shape_cast %27 : vector<64xf32> to vector<64x1xf32>
    %29 = tpu.reciprocal %28 {approx = true} : vector<64x1xf32> -> vector<64x1xf32>
    %30 = vector.broadcast %29 : vector<64x1xf32> to vector<64x64xf32>
    %31 = arith.mulf %14, %30 : vector<64x64xf32>
    %32 = arith.truncf %31 : vector<64x64xf32> to vector<64x64xbf16>
    %c0_11 = arith.constant 0 : index
    %c0_12 = arith.constant 0 : index
    %c0_13 = arith.constant 0 : index
    %33 = vector.load %arg4[%c0_11, %c0_12, %c0_13] : memref<1x64x128xbf16, #tpu.memory_space<vmem>>, vector<1x64x128xbf16>
    %34 = vector.shape_cast %33 : vector<1x64x128xbf16> to vector<64x128xbf16>
    %cst_14 = arith.constant dense<0.000000e+00> : vector<64x128xf32>
    %35 = tpu.matmul %32, %34, %cst_14 {dimension_numbers = #tpu.dot_dimension_numbers<[1], [0], [0], [1], [0, 0, 1, 1], [], []>} : vector<64x64xbf16>, vector<64x128xbf16>, vector<64x128xf32> -> vector<64x128xf32>
    %cst_15 = arith.constant 2.500000e-01 : f32
    %36 = vector.broadcast %cst_15 : f32 to vector<64x128xf32>
    %37 = arith.mulf %35, %36 : vector<64x128xf32>
    %38 = arith.truncf %37 : vector<64x128xf32> to vector<64x128xbf16>
    %c0_16 = arith.constant 0 : index
    %c0_17 = arith.constant 0 : index
    %c0_18 = arith.constant 0 : index
    %39 = vector.load %arg5[%c0_16, %c0_17, %c0_18] : memref<1x64x128xbf16, #tpu.memory_space<vmem>>, vector<1x64x128xbf16>
    %40 = vector.shape_cast %39 : vector<1x64x128xbf16> to vector<64x128xbf16>
    %41 = vector.shape_cast %38 : vector<64x128xbf16> to vector<1x64x128xbf16>
    tpu.vector_store %arg5[%c0_16, %c0_17, %c0_18], %41 {strides = array<i32>} : memref<1x64x128xbf16, #tpu.memory_space<vmem>>, vector<1x64x128xbf16>,
    return
  }
  func.func @transform_0(%arg0: i32, %arg1: i32) -> (i32, i32, i32) {
    %c0_i32 = arith.constant 0 : i32
    %c0_i32_0 = arith.constant 0 : i32
    return %arg0, %arg1, %c0_i32 : i32, i32, i32
  }
  func.func @transform_1(%arg0: i32, %arg1: i32) -> (i32, i32) {
    %c0_i32 = arith.constant 0 : i32
    %c0_i32_0 = arith.constant 0 : i32
    %c0_i32_1 = arith.constant 0 : i32
    return %c0_i32, %c0_i32_0 : i32, i32
  }
  func.func @transform_2(%arg0: i32, %arg1: i32) -> (i32, i32, i32) {
    %c0_i32 = arith.constant 0 : i32
    %c0_i32_0 = arith.constant 0 : i32
    %c0_i32_1 = arith.constant 0 : i32
    return %arg0, %c0_i32, %c0_i32_0 : i32, i32, i32
  }
  func.func @transform_3(%arg0: i32, %arg1: i32) -> (i32, i32, i32) {
    %c0_i32 = arith.constant 0 : i32
    %c0_i32_0 = arith.constant 0 : i32
    return %arg0, %arg1, %c0_i32 : i32, i32, i32
  }
  func.func @transform_4(%arg0: i32, %arg1: i32) -> (i32, i32, i32) {
    %c0_i32 = arith.constant 0 : i32
    %c0_i32_0 = arith.constant 0 : i32
    return %arg0, %arg1, %c0_i32 : i32, i32, i32
  }
}

module attributes {stable_mosaic.version = 11 : i64} {
  func.func @_conv_bias_elu_kernel(%arg0: i32, %arg1: i32, %arg2: memref<4x128xbf16, #tpu.memory_space<vmem>>, %arg3: memref<1x128x256xbf16, #tpu.memory_space<vmem>>, %arg4: memref<4x1xf32, #tpu.memory_space<vmem>>, %arg5: memref<1x4x256xbf16, #tpu.memory_space<vmem>>) attributes {dimension_semantics = [#tpu.dimension_semantics<parallel>, #tpu.dimension_semantics<parallel>], iteration_bounds = array<i64: 2, 1>, scalar_prefetch = 0 : i64, scratch_operands = 0 : i64, tpu.core_type = #tpu.core_type<tc>, window_params = [{pipeline_mode = #tpu.pipeline_mode<synchronous>, transform_indices = @transform_0, window_bounds = array<i64: 4, 128>}, {transform_indices = @transform_1, window_bounds = array<i64: 1, 128, 256>}, {pipeline_mode = #tpu.pipeline_mode<synchronous>, transform_indices = @transform_2, window_bounds = array<i64: 4, 1>}, {transform_indices = @transform_3, window_bounds = array<i64: 1, 4, 256>}]} {
    %c0 = arith.constant 0 : index
    %c0_0 = arith.constant 0 : index
    %0 = vector.load %arg2[%c0, %c0_0] : memref<4x128xbf16, #tpu.memory_space<vmem>>, vector<4x128xbf16>
    %c0_1 = arith.constant 0 : index
    %c0_2 = arith.constant 0 : index
    %c0_3 = arith.constant 0 : index
    %1 = vector.load %arg3[%c0_1, %c0_2, %c0_3] : memref<1x128x256xbf16, #tpu.memory_space<vmem>>, vector<1x128x256xbf16>
    %2 = vector.shape_cast %1 : vector<1x128x256xbf16> to vector<128x256xbf16>
    %cst = arith.constant dense<0.000000e+00> : vector<4x256xf32>
    %3 = tpu.matmul %0, %2, %cst {dimension_numbers = #tpu.dot_dimension_numbers<[1], [0], [0], [1], [0, 0, 1, 1], [], []>} : vector<4x128xbf16>, vector<128x256xbf16>, vector<4x256xf32> -> vector<4x256xf32>
    %c0_4 = arith.constant 0 : index
    %c0_5 = arith.constant 0 : index
    %4 = vector.load %arg4[%c0_4, %c0_5] : memref<4x1xf32, #tpu.memory_space<vmem>>, vector<4x1xf32>
    %5 = vector.broadcast %4 : vector<4x1xf32> to vector<4x256xf32>
    %6 = arith.addf %3, %5 : vector<4x256xf32>
    %cst_6 = arith.constant 0.000000e+00 : f32
    %7 = vector.broadcast %cst_6 : f32 to vector<4x256xf32>
    %8 = arith.cmpf ogt, %6, %7 : vector<4x256xf32>
    %cst_7 = arith.constant 0.000000e+00 : f32
    %9 = vector.broadcast %cst_7 : f32 to vector<4x256xf32>
    %10 = arith.minimumf %6, %9 : vector<4x256xf32>
    %11 = math.exp %10 : vector<4x256xf32>
    %cst_8 = arith.constant 1.000000e+00 : f32
    %12 = vector.broadcast %cst_8 : f32 to vector<4x256xf32>
    %13 = arith.subf %11, %12 : vector<4x256xf32>
    %14 = arith.select %8, %6, %13 : vector<4x256xi1>, vector<4x256xf32>
    %15 = arith.truncf %14 : vector<4x256xf32> to vector<4x256xbf16>
    %c0_9 = arith.constant 0 : index
    %c0_10 = arith.constant 0 : index
    %c0_11 = arith.constant 0 : index
    %16 = vector.load %arg5[%c0_9, %c0_10, %c0_11] : memref<1x4x256xbf16, #tpu.memory_space<vmem>>, vector<1x4x256xbf16>
    %17 = vector.shape_cast %16 : vector<1x4x256xbf16> to vector<4x256xbf16>
    %18 = vector.shape_cast %15 : vector<4x256xbf16> to vector<1x4x256xbf16>
    tpu.vector_store %arg5[%c0_9, %c0_10, %c0_11], %18 {strides = array<i32>} : memref<1x4x256xbf16, #tpu.memory_space<vmem>>, vector<1x4x256xbf16>,
    return
  }
  func.func @transform_0(%arg0: i32, %arg1: i32) -> (i32, i32) {
    %c0_i32 = arith.constant 0 : i32
    %c0_i32_0 = arith.constant 0 : i32
    %c0_i32_1 = arith.constant 0 : i32
    return %c0_i32, %c0_i32_0 : i32, i32
  }
  func.func @transform_1(%arg0: i32, %arg1: i32) -> (i32, i32, i32) {
    %c0_i32 = arith.constant 0 : i32
    %c0_i32_0 = arith.constant 0 : i32
    return %arg0, %c0_i32, %arg1 : i32, i32, i32
  }
  func.func @transform_2(%arg0: i32, %arg1: i32) -> (i32, i32) {
    %c0_i32 = arith.constant 0 : i32
    %c0_i32_0 = arith.constant 0 : i32
    %c0_i32_1 = arith.constant 0 : i32
    return %c0_i32, %c0_i32_0 : i32, i32
  }
  func.func @transform_3(%arg0: i32, %arg1: i32) -> (i32, i32, i32) {
    %c0_i32 = arith.constant 0 : i32
    %c0_i32_0 = arith.constant 0 : i32
    return %arg0, %c0_i32, %arg1 : i32, i32, i32
  }
}

module attributes {stable_mosaic.version = 11 : i64} {
  func.func @_conv_bias_elu_kernel(%arg0: i32, %arg1: i32, %arg2: memref<4x128xbf16, #tpu.memory_space<vmem>>, %arg3: memref<1x128x256xbf16, #tpu.memory_space<vmem>>, %arg4: memref<4x1xf32, #tpu.memory_space<vmem>>, %arg5: memref<1x4x256xf32, #tpu.memory_space<vmem>>) attributes {dimension_semantics = [#tpu.dimension_semantics<parallel>, #tpu.dimension_semantics<parallel>], iteration_bounds = array<i64: 2, 1>, scalar_prefetch = 0 : i64, scratch_operands = 0 : i64, tpu.core_type = #tpu.core_type<tc>, window_params = [{pipeline_mode = #tpu.pipeline_mode<synchronous>, transform_indices = @transform_0, window_bounds = array<i64: 4, 128>}, {transform_indices = @transform_1, window_bounds = array<i64: 1, 128, 256>}, {pipeline_mode = #tpu.pipeline_mode<synchronous>, transform_indices = @transform_2, window_bounds = array<i64: 4, 1>}, {transform_indices = @transform_3, window_bounds = array<i64: 1, 4, 256>}]} {
    %c0 = arith.constant 0 : index
    %c0_0 = arith.constant 0 : index
    %0 = vector.load %arg2[%c0, %c0_0] : memref<4x128xbf16, #tpu.memory_space<vmem>>, vector<4x128xbf16>
    %c0_1 = arith.constant 0 : index
    %c0_2 = arith.constant 0 : index
    %c0_3 = arith.constant 0 : index
    %1 = vector.load %arg3[%c0_1, %c0_2, %c0_3] : memref<1x128x256xbf16, #tpu.memory_space<vmem>>, vector<1x128x256xbf16>
    %2 = vector.shape_cast %1 : vector<1x128x256xbf16> to vector<128x256xbf16>
    %cst = arith.constant dense<0.000000e+00> : vector<4x256xf32>
    %3 = tpu.matmul %0, %2, %cst {dimension_numbers = #tpu.dot_dimension_numbers<[1], [0], [0], [1], [0, 0, 1, 1], [], []>} : vector<4x128xbf16>, vector<128x256xbf16>, vector<4x256xf32> -> vector<4x256xf32>
    %c0_4 = arith.constant 0 : index
    %c0_5 = arith.constant 0 : index
    %4 = vector.load %arg4[%c0_4, %c0_5] : memref<4x1xf32, #tpu.memory_space<vmem>>, vector<4x1xf32>
    %5 = vector.broadcast %4 : vector<4x1xf32> to vector<4x256xf32>
    %6 = arith.addf %3, %5 : vector<4x256xf32>
    %cst_6 = arith.constant 0.000000e+00 : f32
    %7 = vector.broadcast %cst_6 : f32 to vector<4x256xf32>
    %8 = arith.cmpf ogt, %6, %7 : vector<4x256xf32>
    %cst_7 = arith.constant 0.000000e+00 : f32
    %9 = vector.broadcast %cst_7 : f32 to vector<4x256xf32>
    %10 = arith.minimumf %6, %9 : vector<4x256xf32>
    %11 = math.exp %10 : vector<4x256xf32>
    %cst_8 = arith.constant 1.000000e+00 : f32
    %12 = vector.broadcast %cst_8 : f32 to vector<4x256xf32>
    %13 = arith.subf %11, %12 : vector<4x256xf32>
    %14 = arith.select %8, %6, %13 : vector<4x256xi1>, vector<4x256xf32>
    %c0_9 = arith.constant 0 : index
    %c0_10 = arith.constant 0 : index
    %c0_11 = arith.constant 0 : index
    %15 = vector.load %arg5[%c0_9, %c0_10, %c0_11] : memref<1x4x256xf32, #tpu.memory_space<vmem>>, vector<1x4x256xf32>
    %16 = vector.shape_cast %15 : vector<1x4x256xf32> to vector<4x256xf32>
    %17 = vector.shape_cast %14 : vector<4x256xf32> to vector<1x4x256xf32>
    tpu.vector_store %arg5[%c0_9, %c0_10, %c0_11], %17 {strides = array<i32>} : memref<1x4x256xf32, #tpu.memory_space<vmem>>, vector<1x4x256xf32>,
    return
  }
  func.func @transform_0(%arg0: i32, %arg1: i32) -> (i32, i32) {
    %c0_i32 = arith.constant 0 : i32
    %c0_i32_0 = arith.constant 0 : i32
    %c0_i32_1 = arith.constant 0 : i32
    return %c0_i32, %c0_i32_0 : i32, i32
  }
  func.func @transform_1(%arg0: i32, %arg1: i32) -> (i32, i32, i32) {
    %c0_i32 = arith.constant 0 : i32
    %c0_i32_0 = arith.constant 0 : i32
    return %arg0, %c0_i32, %arg1 : i32, i32, i32
  }
  func.func @transform_2(%arg0: i32, %arg1: i32) -> (i32, i32) {
    %c0_i32 = arith.constant 0 : i32
    %c0_i32_0 = arith.constant 0 : i32
    %c0_i32_1 = arith.constant 0 : i32
    return %c0_i32, %c0_i32_0 : i32, i32
  }
  func.func @transform_3(%arg0: i32, %arg1: i32) -> (i32, i32, i32) {
    %c0_i32 = arith.constant 0 : i32
    %c0_i32_0 = arith.constant 0 : i32
    return %arg0, %c0_i32, %arg1 : i32, i32, i32
  }
}

</mosaic_0001>

<llo_original>
// kernel: contextual_attention_forward.4
$region0: #{contextual_attention_forward.4}
  #allocation0 [shape = 'u32[]', space=smem, size = 0x4, offset = 0x4, fixed_abs, tag = 'smem constant byte address 0x4 - core index']
  #allocation1 [shape = 'u32[144,128]{1,0:T(1,128)}', space=vmem, size = 0x12000, scoped, tag = 'internal scratch']
  %s0 = inlined_call_operand.vmem [shape: bf16[2,64,128], index: 0, kind: input, shape index: {}]
  %s1 = inlined_call_operand.vmem [shape: bf16[2,128,64], index: 1, kind: input, shape index: {}]
  %s2 = inlined_call_operand.vmem [shape: bf16[2,64,64], index: 2, kind: output, shape index: {}]
  %s3 = sld [smem:[#allocation0]]
  $region41: #{contextual_attention_forward.4} parent=0
    _
  %s5 = ssub.s32 1, %s3
  %s6 = scalar_select 0, %s5, %s3
  loop: start=0, step=1, limit=4
  $region2: #{contextual_attention_forward.4} parent=0 // loop_pre_header
    _
  $region3: #{contextual_attention_forward.4} parent=0 // loop_header
    %s8 = sphi 0, %s12
    %p9 = scmp.ge.s32.totalorder %s8, 4
    %s15 = sphi 0, %s27
    %s16 = sphi 0, %s23
    %s17 = sphi 0, %s15
    %s18 = sphi 0, %s16
    %s19 = sphi 0, %s17
    %s20 = sphi 0, %s18
    %s32 = sphi 0, %s34
    %s35 = sphi 0, %s32
    %s36 = sphi 0, %s35
    %s52 = sphi 0, %s36
    %s58 = sphi 0, %s60
    %s61 = sphi 0, %s58
    %s62 = sphi 0, %s61
    %s78 = sphi 0, %s62
    %s86 = sphi 0, %s88
    %s89 = sphi 0, %s86
    %s90 = sphi 0, %s89
    %s106 = sphi 0, %s90
  $region4: #{contextual_attention_forward.4} parent=0 // loop_header_branch
    %11 = sbr.rel (%p9) target = $region8
  $region5: #{contextual_attention_forward.4} parent=0 // loop_body
    %s13 = ssub.s32 %s8, 1
    %s14 = ssub.s32 %s8, 2
    %s21 = sadd.s32 1, %s16
    %p22 = scmp.ge.s32.totalorder %s21, 1
    %s23 = scalar_select %p22, 0, %s21
    %s24 = sadd.s32 1, %s15
    %s25 = scalar_select %p22, %s24, %s15
    %p26 = scmp.ge.s32.totalorder %s25, 2
    %s27 = scalar_select %p26, 0, %s25
    %s28 = ssub.s32 %s15, %s27
    %s29 = ssub.s32 %s16, %s23
    %s30 = sor.u32 %s28, %s29
    %p31 = scmp.eq.s32.totalorder %s30, 0
    %s33 = sadd.s32 %s32, 1
    %s34 = scalar_select %p31, %s32, %s33
    %p37 = pneg %p31
    %p38 = scmp.eq.s32.totalorder %s8, 1
    %p39 = por %p37, %p38
    %p40 = scmp.ne.s32.totalorder %s32, %s35
    %p41 = scmp.eq.s32.totalorder %s8, 0
    %p42 = por %p40, %p41
    %p43 = scmp.ne.s32.totalorder %s32, %s35
    %p44 = scmp.eq.s32.totalorder %s13, 1
    %p45 = por %p43, %p44
    %p46 = scmp.ne.s32.totalorder %s35, %s36
    %p47 = scmp.eq.s32.totalorder %s13, 0
    %p48 = por %p46, %p47
    %p49 = scmp.ne.s32.totalorder %s35, %s36
    %p50 = scmp.eq.s32.totalorder %s14, 1
    %p51 = por %p49, %p50
    %p53 = scmp.ne.s32.totalorder %s36, %s52
    %p54 = scmp.eq.s32.totalorder %s14, 0
    %p55 = por %p53, %p54
    %s56 = ssub.s32 %s15, %s27
    %p57 = scmp.eq.s32.totalorder %s56, 0
    %s59 = sadd.s32 %s58, 1
    %s60 = scalar_select %p57, %s58, %s59
    %p63 = pneg %p57
    %p64 = scmp.eq.s32.totalorder %s8, 1
    %p65 = por %p63, %p64
    %p66 = scmp.ne.s32.totalorder %s58, %s61
    %p67 = scmp.eq.s32.totalorder %s8, 0
    %p68 = por %p66, %p67
    %p69 = scmp.ne.s32.totalorder %s58, %s61
    %p70 = scmp.eq.s32.totalorder %s13, 1
    %p71 = por %p69, %p70
    %p72 = scmp.ne.s32.totalorder %s61, %s62
    %p73 = scmp.eq.s32.totalorder %s13, 0
    %p74 = por %p72, %p73
    %p75 = scmp.ne.s32.totalorder %s61, %s62
    %p76 = scmp.eq.s32.totalorder %s14, 1
    %p77 = por %p75, %p76
    %p79 = scmp.ne.s32.totalorder %s62, %s78
    %p80 = scmp.eq.s32.totalorder %s14, 0
    %p81 = por %p79, %p80
    %s82 = ssub.s32 %s15, %s27
    %s83 = ssub.s32 %s16, %s23
    %s84 = sor.u32 %s82, %s83
    %p85 = scmp.eq.s32.totalorder %s84, 0
    %s87 = sadd.s32 %s86, 1
    %s88 = scalar_select %p85, %s86, %s87
    %p91 = pneg %p85
    %p92 = scmp.eq.s32.totalorder %s8, 1
    %p93 = por %p91, %p92
    %p94 = scmp.ne.s32.totalorder %s86, %s89
    %p95 = scmp.eq.s32.totalorder %s8, 0
    %p96 = por %p94, %p95
    %p97 = scmp.ne.s32.totalorder %s86, %s89
    %p98 = scmp.eq.s32.totalorder %s13, 1
    %p99 = por %p97, %p98
    %p100 = scmp.ne.s32.totalorder %s89, %s90
    %p101 = scmp.eq.s32.totalorder %s13, 0
    %p102 = por %p100, %p101
    %p103 = scmp.ne.s32.totalorder %s89, %s90
    %p104 = scmp.eq.s32.totalorder %s14, 1
    %p105 = por %p103, %p104
    %p107 = scmp.ne.s32.totalorder %s90, %s106
    %p108 = scmp.eq.s32.totalorder %s14, 0
    %p109 = por %p107, %p108
    %p110 = scmp.le.s32.totalorder 1, %s8
    %p111 = scmp.lt.s32.totalorder %s8, 3
    %p112 = pnand %p110, %p111
    %p113 = pneg %p112
    // Predicated region
    $region9: #{contextual_attention_forward.4} parent=5 // pred_check
      _
    $region10: #{contextual_attention_forward.4} parent=5 // pred_check_branch
      %115 = sbr.rel (%p112) target = $region12
    $region11: #{contextual_attention_forward.4} parent=5 // pred_region
      %s116 = ssub.s32 %s8, 1
    $region12: #{contextual_attention_forward.4} parent=5 // pred_fallthru
      _
    %p117 = scmp.lt.s32.totalorder %s8, 2
    // Predicated region
    $region13: #{contextual_attention_forward.4} parent=5 // pred_check
      %p118 = pneg %p117
    $region14: #{contextual_attention_forward.4} parent=5 // pred_check_branch
      %120 = sbr.rel (%p118) target = $region16
    $region15: #{contextual_attention_forward.4} parent=5 // pred_region
      // Predicated region
      $region17: #{contextual_attention_forward.4} parent=15 // pred_check
        %p121 = pneg %p42
      $region18: #{contextual_attention_forward.4} parent=15 // pred_check_branch
        %123 = sbr.rel (%p121) target = $region20
      $region19: #{contextual_attention_forward.4} parent=15 // pred_region
        %s124 = smul.u32 8, %s16
        %p125 = scmp.lt.s32.totalorder %s15, 1
        %s126 = scalar_select %p125, %s15, 1
        %p127 = scmp.lt.s32.totalorder %s124, 7
        %s128 = scalar_select %p127, %s124, 7
        %s129 = smul.addr %s126, 8
        %s130 = sadd.s32 %s128, %s129
        %s131 = smul.addr %s130, 4
        %s132 = scalar_lea.vmem %s0, %s131
        %s133 = smul.u32 8, %s16
      $region20: #{contextual_attention_forward.4} parent=15 // pred_fallthru
        _
      // Predicated region
      $region21: #{contextual_attention_forward.4} parent=15 // pred_check
        %p134 = pneg %p68
      $region22: #{contextual_attention_forward.4} parent=15 // pred_check_branch
        %136 = sbr.rel (%p134) target = $region24
      $region23: #{contextual_attention_forward.4} parent=15 // pred_region
        %p137 = scmp.lt.s32.totalorder %s15, 1
        %s138 = scalar_select %p137, %s15, 1
        %s139 = smul.addr %s138, 16
        %s140 = smul.addr %s139, 4
        %s141 = scalar_lea.vmem %s1, %s140
      $region24: #{contextual_attention_forward.4} parent=15 // pred_fallthru
        _
    $region16: #{contextual_attention_forward.4} parent=5 // pred_fallthru
      _
    %p142 = scmp.le.s32.totalorder 1, %s8
    %p143 = scmp.lt.s32.totalorder %s8, 3
    %p144 = pnand %p142, %p143
    %p145 = pneg %p144
    // Predicated region
    $region25: #{contextual_attention_forward.4} parent=5 // pred_check
      _
    $region26: #{contextual_attention_forward.4} parent=5 // pred_check_branch
      %147 = sbr.rel (%p144) target = $region28
    $region27: #{contextual_attention_forward.4} parent=5 // pred_region
      %s148 = ssub.s32 %s8, 1
      %s149 = smul.u32 8, %s18
      %p150 = scmp.lt.s32.totalorder %s17, 1
      %s151 = scalar_select %p150, %s17, 1
      %p152 = scmp.lt.s32.totalorder %s149, 7
      %s153 = scalar_select %p152, %s149, 7
      %s154 = smul.addr %s151, 8
      %s155 = sadd.s32 %s153, %s154
      %s156 = smul.addr %s155, 4
      %s157 = scalar_lea.vmem %s0, %s156
      %p158 = pneg %p48
      %p159 = pneg %p45
      %p160 = scmp.lt.s32.totalorder %s17, 1
      %s161 = scalar_select %p160, %s17, 1
      %s162 = smul.addr %s161, 16
      %s163 = smul.addr %s162, 4
      %s164 = scalar_lea.vmem %s1, %s163
      %p165 = pneg %p74
      %p166 = pneg %p71
      %p167 = pneg %p102
      %p168 = pneg %p99
      %s169 = smul.u32 8, %s18
      %p170 = scmp.lt.s32.totalorder %s17, 1
      %s171 = scalar_select %p170, %s17, 1
      %p172 = scmp.lt.s32.totalorder %s169, 7
      %s173 = scalar_select %p172, %s169, 7
      %s174 = smul.addr %s171, 8
      %s175 = sadd.s32 %s173, %s174
      %s176 = smul.addr %s175, 4
      %s177 = scalar_lea.vmem %s2, %s176
      %s178 = smul.u32 8, %s18
      %p179 = scmp.lt.s32.totalorder %s17, 1
      %s180 = scalar_select %p179, %s17, 1
      %p181 = scmp.lt.s32.totalorder %s178, 7
      %s182 = scalar_select %p181, %s178, 7
      %s183 = smul.addr %s180, 8
      %s184 = sadd.s32 %s182, %s183
      %s185 = smul.addr %s184, 4
      %s186 = scalar_lea.vmem %s0, %s185
      %s187 = smul.u32 8, %s18
      %p188 = scmp.lt.s32.totalorder %s17, 1
      %s189 = scalar_select %p188, %s17, 1
      %s190 = smul.addr %s189, 16
      %s191 = smul.addr %s190, 4
      %s192 = scalar_lea.vmem %s1, %s191
      %s193 = smul.u32 8, %s18
      %p194 = scmp.lt.s32.totalorder %s17, 1
      %s195 = scalar_select %p194, %s17, 1
      %p196 = scmp.lt.s32.totalorder %s193, 7
      %s197 = scalar_select %p196, %s193, 7
      %s198 = smul.addr %s195, 8
      %s199 = sadd.s32 %s197, %s198
      %s200 = smul.addr %s199, 4
      %s201 = scalar_lea.vmem %s2, %s200
      %s202 = smul.u32 8, %s18
      %v204 = vld [vmem:[%s186] sm:$0xf]
      %v205 = vld [vmem:[%s186 + $0x4] sm:$0xf]
      %v206 = vld [vmem:[%s186 + $0x8] sm:$0xf]
      %v207 = vld [vmem:[%s186 + $0xc] sm:$0xf]
      %v208 = vld [vmem:[%s186 + $0x10] sm:$0xf]
      %v209 = vld [vmem:[%s186 + $0x14] sm:$0xf]
      %v210 = vld [vmem:[%s186 + $0x18] sm:$0xf]
      %v211 = vld [vmem:[%s186 + $0x1c] sm:$0xf]
      %v212 = vld [vmem:[%s192] sm:$0xf]
      %v213 = vld [vmem:[%s192 + $0x4] sm:$0xf]
      %v214 = vld [vmem:[%s192 + $0x8] sm:$0xf]
      %v215 = vld [vmem:[%s192 + $0xc] sm:$0xf]
      %v216 = vld [vmem:[%s192 + $0x10] sm:$0xf]
      %v217 = vld [vmem:[%s192 + $0x14] sm:$0xf]
      %v218 = vld [vmem:[%s192 + $0x18] sm:$0xf]
      %v219 = vld [vmem:[%s192 + $0x1c] sm:$0xf]
      %v220 = vld [vmem:[%s192 + $0x20] sm:$0xf]
      %v221 = vld [vmem:[%s192 + $0x24] sm:$0xf]
      %v222 = vld [vmem:[%s192 + $0x28] sm:$0xf]
      %v223 = vld [vmem:[%s192 + $0x2c] sm:$0xf]
      %v224 = vld [vmem:[%s192 + $0x30] sm:$0xf]
      %v225 = vld [vmem:[%s192 + $0x34] sm:$0xf]
      %v226 = vld [vmem:[%s192 + $0x38] sm:$0xf]
      %v227 = vld [vmem:[%s192 + $0x3c] sm:$0xf]
      %v236 = vunpack.c.l.b16 %v204
      %v237 = vunpack.c.l.b16 %v205
      %v238 = vunpack.c.l.b16 %v206
      %v239 = vunpack.c.l.b16 %v207
      %v240 = vunpack.c.l.b16 %v208
      %v241 = vunpack.c.l.b16 %v209
      %v242 = vunpack.c.l.b16 %v210
      %v243 = vunpack.c.l.b16 %v211
      %v244 = vpack.c.b16 %v237, %v236
      %v245 = vpack.c.b16 %v239, %v238
      %v246 = vpack.c.b16 %v241, %v240
      %v247 = vpack.c.b16 %v243, %v242
      %v268 = vunpack.c.l.b16 %v212
      %v269 = vunpack.c.l.b16 %v213
      %v270 = vunpack.c.l.b16 %v214
      %v271 = vunpack.c.l.b16 %v215
      %v272 = vunpack.c.l.b16 %v216
      %v273 = vunpack.c.l.b16 %v217
      %v274 = vunpack.c.l.b16 %v218
      %v275 = vunpack.c.l.b16 %v219
      %v276 = vunpack.c.l.b16 %v220
      %v277 = vunpack.c.l.b16 %v221
      %v278 = vunpack.c.l.b16 %v222
      %v279 = vunpack.c.l.b16 %v223
      %v280 = vunpack.c.l.b16 %v224
      %v281 = vunpack.c.l.b16 %v225
      %v282 = vunpack.c.l.b16 %v226
      %v283 = vunpack.c.l.b16 %v227
      %v284 = vpack.c.b16 %v269, %v268
      %v285 = vpack.c.b16 %v271, %v270
      %v286 = vpack.c.b16 %v273, %v272
      %v287 = vpack.c.b16 %v275, %v274
      %v288 = vpack.c.b16 %v277, %v276
      %v289 = vpack.c.b16 %v279, %v278
      %v290 = vpack.c.b16 %v281, %v280
      %v291 = vpack.c.b16 %v283, %v282
      %300 = vmatprep.subr.bf16.mxu0 0
      %301 = vmatpush1.bf16.msra.mxu0 %v291
      %302 = vmatprep.subr.bf16.mxu0 0
      %303 = vmatpush1.bf16.msra.mxu0 %v290
      %304 = vmatprep.subr.bf16.mxu0 0
      %305 = vmatpush1.bf16.msra.mxu0 %v289
      %306 = vmatprep.subr.bf16.mxu0 0
      %307 = vmatpush1.bf16.msra.mxu0 %v288
      %308 = vmatprep.subr.bf16.mxu0 0
      %309 = vmatpush1.bf16.msra.mxu0 %v287
      %310 = vmatprep.subr.bf16.mxu0 0
      %311 = vmatpush1.bf16.msra.mxu0 %v286
      %312 = vmatprep.subr.bf16.mxu0 0
      %313 = vmatpush1.bf16.msra.mxu0 %v285
      %314 = vmatprep.subr.bf16.mxu0 0
      %315 = vmatpush1.bf16.msra.mxu0 %v284
      %316 = vmatprep.subr.bf16.mxu0 0
      %317 = vmatpush2.bf16.msra.mxu0 0
      %318 = vmatprep.subr.bf16.mxu0 0
      %319 = vmatpush2.bf16.msra.mxu0 0
      %320 = vmatprep.subr.bf16.mxu0 0
      %321 = vmatpush2.bf16.msra.mxu0 0
      %322 = vmatprep.subr.bf16.mxu0 0
      %323 = vmatpush2.bf16.msra.mxu0 0
      %324 = vmatprep.subr.bf16.mxu0 0
      %325 = vmatpush2.bf16.msra.mxu0 0
      %326 = vmatprep.subr.bf16.mxu0 0
      %327 = vmatpush2.bf16.msra.mxu0 0
      %328 = vmatprep.subr.bf16.mxu0 0
      %329 = vmatpush2.bf16.msra.mxu0 0
      %330 = vmatprep.subr.bf16.mxu0 0
      %331 = vmatpush2.bf16.msra.mxu0 0
      %332 = vmatprep.mubr.bf16.mxu0 0
      %333 = vmatmul.mubr.bf16.gmra.mxu0 %v244
      %v334 = vpop.f32.mrf.mxu0
      %v335 = vadd.f32 0.0, %v334
      %v336 = vpop.f32.mrf.mxu0
      %v337 = vpop.f32.mrf.mxu0
      %v338 = vadd.f32 0.0, %v337
      %v339 = vpop.f32.mrf.mxu0
      %340 = vmatprep.mubr.bf16.mxu0 0
      %341 = vmatmul.mubr.bf16.gmra.mxu0 %v245
      %v342 = vpop.f32.mrf.mxu0
      %v343 = vadd.f32 0.0, %v342
      %v344 = vpop.f32.mrf.mxu0
      %v345 = vpop.f32.mrf.mxu0
      %v346 = vadd.f32 0.0, %v345
      %v347 = vpop.f32.mrf.mxu0
      %348 = vmatprep.mubr.bf16.mxu0 0
      %349 = vmatmul.mubr.bf16.gmra.mxu0 %v246
      %v350 = vpop.f32.mrf.mxu0
      %v351 = vadd.f32 0.0, %v350
      %v352 = vpop.f32.mrf.mxu0
      %v353 = vpop.f32.mrf.mxu0
      %v354 = vadd.f32 0.0, %v353
      %v355 = vpop.f32.mrf.mxu0
      %356 = vmatprep.mubr.bf16.mxu0 0
      %357 = vmatmul.mubr.bf16.gmra.mxu0 %v247
      %v358 = vpop.f32.mrf.mxu0
      %v359 = vadd.f32 0.0, %v358
      %v360 = vpop.f32.mrf.mxu0
      %v361 = vpop.f32.mrf.mxu0
      %v362 = vadd.f32 0.0, %v361
      %v363 = vpop.f32.mrf.mxu0
      %364 = vdwg.mxu0
      %v365 = vpack.c.bf16 %v338, %v335
      %v366 = vpack.c.bf16 %v346, %v343
      %v367 = vpack.c.bf16 %v354, %v351
      %v368 = vpack.c.bf16 %v362, %v359
      %v373 = vunpack.c.l.b16 %v365
      %v374 = vunpack.c.h.b16 %v365
      %v375 = vunpack.c.l.b16 %v366
      %v376 = vunpack.c.h.b16 %v366
      %v377 = vunpack.c.l.b16 %v367
      %v378 = vunpack.c.h.b16 %v367
      %v379 = vunpack.c.l.b16 %v368
      %v380 = vunpack.c.h.b16 %v368
      %v381 = vpack.c.b16 %v373, %v373
      %v382 = vpack.c.b16 %v374, %v374
      %v383 = vpack.c.b16 %v375, %v375
      %v384 = vpack.c.b16 %v376, %v376
      %v385 = vpack.c.b16 %v377, %v377
      %v386 = vpack.c.b16 %v378, %v378
      %v387 = vpack.c.b16 %v379, %v379
      %v388 = vpack.c.b16 %v380, %v380
      %vm397 = vcmask 519168
      %398 = vst.msk [vmem:[%s201] sm:$0xf] %vm397, %v381
      %399 = vst.msk [vmem:[%s201 + $0x4] sm:$0xf] %vm397, %v382
      %400 = vst.msk [vmem:[%s201 + $0x8] sm:$0xf] %vm397, %v383
      %401 = vst.msk [vmem:[%s201 + $0xc] sm:$0xf] %vm397, %v384
      %402 = vst.msk [vmem:[%s201 + $0x10] sm:$0xf] %vm397, %v385
      %403 = vst.msk [vmem:[%s201 + $0x14] sm:$0xf] %vm397, %v386
      %404 = vst.msk [vmem:[%s201 + $0x18] sm:$0xf] %vm397, %v387
      %405 = vst.msk [vmem:[%s201 + $0x1c] sm:$0xf] %vm397, %v388
      %s406 = smul.u32 8, %s18
      %p407 = scmp.lt.s32.totalorder %s17, 1
      %s408 = scalar_select %p407, %s17, 1
      %p409 = scmp.lt.s32.totalorder %s406, 7
      %s410 = scalar_select %p409, %s406, 7
      %s411 = smul.addr %s408, 8
      %s412 = sadd.s32 %s410, %s411
      %s413 = smul.addr %s412, 4
      %s414 = scalar_lea.vmem %s2, %s413
      // Predicated region
      $region29: #{contextual_attention_forward.4} parent=27 // pred_check
        %p415 = pneg %p99
      $region30: #{contextual_attention_forward.4} parent=27 // pred_check_branch
        %417 = sbr.rel (%p415) target = $region32
      $region31: #{contextual_attention_forward.4} parent=27 // pred_region
        %s418 = smul.u32 8, %s18
      $region32: #{contextual_attention_forward.4} parent=27 // pred_fallthru
        _
    $region28: #{contextual_attention_forward.4} parent=5 // pred_fallthru
      _
    %p419 = scmp.le.s32.totalorder 2, %s8
    // Predicated region
    $region33: #{contextual_attention_forward.4} parent=5 // pred_check
      %p420 = pneg %p419
    $region34: #{contextual_attention_forward.4} parent=5 // pred_check_branch
      %422 = sbr.rel (%p420) target = $region36
    $region35: #{contextual_attention_forward.4} parent=5 // pred_region
      %s423 = ssub.s32 %s8, 2
      // Predicated region
      $region37: #{contextual_attention_forward.4} parent=35 // pred_check
        %p424 = pneg %p105
      $region38: #{contextual_attention_forward.4} parent=35 // pred_check_branch
        %426 = sbr.rel (%p424) target = $region40
      $region39: #{contextual_attention_forward.4} parent=35 // pred_region
        %s427 = smul.u32 8, %s20
        %p428 = scmp.lt.s32.totalorder %s19, 1
        %s429 = scalar_select %p428, %s19, 1
        %p430 = scmp.lt.s32.totalorder %s427, 7
        %s431 = scalar_select %p430, %s427, 7
        %s432 = smul.addr %s429, 8
        %s433 = sadd.s32 %s431, %s432
        %s434 = smul.addr %s433, 4
        %s435 = scalar_lea.vmem %s2, %s434
      $region40: #{contextual_attention_forward.4} parent=35 // pred_fallthru
        _
    $region36: #{contextual_attention_forward.4} parent=5 // pred_fallthru
      _
  $region6: #{contextual_attention_forward.4} parent=0 // loop_footer
    %s12 = sadd.s32 1, %s8
  $region7: #{contextual_attention_forward.4} parent=0 // loop_footer_branch
    %7 = sbr.rel target = $region3
  $region8: #{contextual_attention_forward.4} parent=0 // loop_exit
    _

// kernel: contextual_attention_forward.5
$region0: #{contextual_attention_forward.5}
  #allocation0 [shape = 'u32[]', space=smem, size = 0x4, offset = 0x4, fixed_abs, tag = 'smem constant byte address 0x4 - core index']
  #allocation1 [shape = 'u32[144,128]{1,0:T(1,128)}', space=vmem, size = 0x12000, scoped, tag = 'internal scratch']
  %s0 = inlined_call_operand.vmem [shape: bf16[2,64,64], index: 0, kind: input, shape index: {}]
  %s1 = inlined_call_operand.vmem [shape: f32[1,64], index: 1, kind: input, shape index: {}]
  %s2 = inlined_call_operand.vmem [shape: bf16[2,64,128], index: 2, kind: input, shape index: {}]
  %s3 = inlined_call_operand.vmem [shape: bf16[2,64,128], index: 3, kind: output, shape index: {0}]
  %s4 = inlined_call_operand.vmem [shape: s32[2,64,1], index: 4, kind: output, shape index: {1}]
  %5 = xla_tuple %s3, %s4
  %s6 = sld [smem:[#allocation0]]
  $region53: #{contextual_attention_forward.5} parent=0
    _
  %s8 = ssub.s32 1, %s6
  %s9 = scalar_select 0, %s8, %s6
  loop: start=0, step=1, limit=4
  $region2: #{contextual_attention_forward.5} parent=0 // loop_pre_header
    _
  $region3: #{contextual_attention_forward.5} parent=0 // loop_header
    %s11 = sphi 0, %s15
    %p12 = scmp.ge.s32.totalorder %s11, 4
    %s18 = sphi 0, %s30
    %s19 = sphi 0, %s26
    %s20 = sphi 0, %s18
    %s21 = sphi 0, %s19
    %s22 = sphi 0, %s20
    %s23 = sphi 0, %s21
    %s35 = sphi 0, %s37
    %s38 = sphi 0, %s35
    %s39 = sphi 0, %s38
    %s55 = sphi 0, %s39
    %s59 = sphi 0, %s59
    %s61 = sphi 0, %s59
    %s62 = sphi 0, %s61
    %s76 = sphi 0, %s62
    %s82 = sphi 0, %s84
    %s85 = sphi 0, %s82
    %s86 = sphi 0, %s85
    %s102 = sphi 0, %s86
    %s110 = sphi 0, %s112
    %s113 = sphi 0, %s110
    %s114 = sphi 0, %s113
    %s130 = sphi 0, %s114
    %s138 = sphi 0, %s140
    %s141 = sphi 0, %s138
    %s142 = sphi 0, %s141
    %s158 = sphi 0, %s142
  $region4: #{contextual_attention_forward.5} parent=0 // loop_header_branch
    %14 = sbr.rel (%p12) target = $region8
  $region5: #{contextual_attention_forward.5} parent=0 // loop_body
    %s16 = ssub.s32 %s11, 1
    %s17 = ssub.s32 %s11, 2
    %s24 = sadd.s32 1, %s19
    %p25 = scmp.ge.s32.totalorder %s24, 1
    %s26 = scalar_select %p25, 0, %s24
    %s27 = sadd.s32 1, %s18
    %s28 = scalar_select %p25, %s27, %s18
    %p29 = scmp.ge.s32.totalorder %s28, 2
    %s30 = scalar_select %p29, 0, %s28
    %s31 = ssub.s32 %s18, %s30
    %s32 = ssub.s32 %s19, %s26
    %s33 = sor.u32 %s31, %s32
    %p34 = scmp.eq.s32.totalorder %s33, 0
    %s36 = sadd.s32 %s35, 1
    %s37 = scalar_select %p34, %s35, %s36
    %p40 = pneg %p34
    %p41 = scmp.eq.s32.totalorder %s11, 1
    %p42 = por %p40, %p41
    %p43 = scmp.ne.s32.totalorder %s35, %s38
    %p44 = scmp.eq.s32.totalorder %s11, 0
    %p45 = por %p43, %p44
    %p46 = scmp.ne.s32.totalorder %s35, %s38
    %p47 = scmp.eq.s32.totalorder %s16, 1
    %p48 = por %p46, %p47
    %p49 = scmp.ne.s32.totalorder %s38, %s39
    %p50 = scmp.eq.s32.totalorder %s16, 0
    %p51 = por %p49, %p50
    %p52 = scmp.ne.s32.totalorder %s38, %s39
    %p53 = scmp.eq.s32.totalorder %s17, 1
    %p54 = por %p52, %p53
    %p56 = scmp.ne.s32.totalorder %s39, %s55
    %p57 = scmp.eq.s32.totalorder %s17, 0
    %p58 = por %p56, %p57
    %s60 = sadd.s32 %s59, 1
    %p63 = scmp.eq.s32.totalorder %s11, 1
    %p64 = scmp.ne.s32.totalorder %s59, %s61
    %p65 = scmp.eq.s32.totalorder %s11, 0
    %p66 = por %p64, %p65
    %p67 = scmp.ne.s32.totalorder %s59, %s61
    %p68 = scmp.eq.s32.totalorder %s16, 1
    %p69 = por %p67, %p68
    %p70 = scmp.ne.s32.totalorder %s61, %s62
    %p71 = scmp.eq.s32.totalorder %s16, 0
    %p72 = por %p70, %p71
    %p73 = scmp.ne.s32.totalorder %s61, %s62
    %p74 = scmp.eq.s32.totalorder %s17, 1
    %p75 = por %p73, %p74
    %p77 = scmp.ne.s32.totalorder %s62, %s76
    %p78 = scmp.eq.s32.totalorder %s17, 0
    %p79 = por %p77, %p78
    %s80 = ssub.s32 %s18, %s30
    %p81 = scmp.eq.s32.totalorder %s80, 0
    %s83 = sadd.s32 %s82, 1
    %s84 = scalar_select %p81, %s82, %s83
    %p87 = pneg %p81
    %p88 = scmp.eq.s32.totalorder %s11, 1
    %p89 = por %p87, %p88
    %p90 = scmp.ne.s32.totalorder %s82, %s85
    %p91 = scmp.eq.s32.totalorder %s11, 0
    %p92 = por %p90, %p91
    %p93 = scmp.ne.s32.totalorder %s82, %s85
    %p94 = scmp.eq.s32.totalorder %s16, 1
    %p95 = por %p93, %p94
    %p96 = scmp.ne.s32.totalorder %s85, %s86
    %p97 = scmp.eq.s32.totalorder %s16, 0
    %p98 = por %p96, %p97
    %p99 = scmp.ne.s32.totalorder %s85, %s86
    %p100 = scmp.eq.s32.totalorder %s17, 1
    %p101 = por %p99, %p100
    %p103 = scmp.ne.s32.totalorder %s86, %s102
    %p104 = scmp.eq.s32.totalorder %s17, 0
    %p105 = por %p103, %p104
    %s106 = ssub.s32 %s18, %s30
    %s107 = ssub.s32 %s19, %s26
    %s108 = sor.u32 %s106, %s107
    %p109 = scmp.eq.s32.totalorder %s108, 0
    %s111 = sadd.s32 %s110, 1
    %s112 = scalar_select %p109, %s110, %s111
    %p115 = pneg %p109
    %p116 = scmp.eq.s32.totalorder %s11, 1
    %p117 = por %p115, %p116
    %p118 = scmp.ne.s32.totalorder %s110, %s113
    %p119 = scmp.eq.s32.totalorder %s11, 0
    %p120 = por %p118, %p119
    %p121 = scmp.ne.s32.totalorder %s110, %s113
    %p122 = scmp.eq.s32.totalorder %s16, 1
    %p123 = por %p121, %p122
    %p124 = scmp.ne.s32.totalorder %s113, %s114
    %p125 = scmp.eq.s32.totalorder %s16, 0
    %p126 = por %p124, %p125
    %p127 = scmp.ne.s32.totalorder %s113, %s114
    %p128 = scmp.eq.s32.totalorder %s17, 1
    %p129 = por %p127, %p128
    %p131 = scmp.ne.s32.totalorder %s114, %s130
    %p132 = scmp.eq.s32.totalorder %s17, 0
    %p133 = por %p131, %p132
    %s134 = ssub.s32 %s18, %s30
    %s135 = ssub.s32 %s19, %s26
    %s136 = sor.u32 %s134, %s135
    %p137 = scmp.eq.s32.totalorder %s136, 0
    %s139 = sadd.s32 %s138, 1
    %s140 = scalar_select %p137, %s138, %s139
    %p143 = pneg %p137
    %p144 = scmp.eq.s32.totalorder %s11, 1
    %p145 = por %p143, %p144
    %p146 = scmp.ne.s32.totalorder %s138, %s141
    %p147 = scmp.eq.s32.totalorder %s11, 0
    %p148 = por %p146, %p147
    %p149 = scmp.ne.s32.totalorder %s138, %s141
    %p150 = scmp.eq.s32.totalorder %s16, 1
    %p151 = por %p149, %p150
    %p152 = scmp.ne.s32.totalorder %s141, %s142
    %p153 = scmp.eq.s32.totalorder %s16, 0
    %p154 = por %p152, %p153
    %p155 = scmp.ne.s32.totalorder %s141, %s142
    %p156 = scmp.eq.s32.totalorder %s17, 1
    %p157 = por %p155, %p156
    %p159 = scmp.ne.s32.totalorder %s142, %s158
    %p160 = scmp.eq.s32.totalorder %s17, 0
    %p161 = por %p159, %p160
    %p162 = scmp.le.s32.totalorder 1, %s11
    %p163 = scmp.lt.s32.totalorder %s11, 3
    %p164 = pnand %p162, %p163
    %p165 = pneg %p164
    // Predicated region
    $region9: #{contextual_attention_forward.5} parent=5 // pred_check
      _
    $region10: #{contextual_attention_forward.5} parent=5 // pred_check_branch
      %167 = sbr.rel (%p164) target = $region12
    $region11: #{contextual_attention_forward.5} parent=5 // pred_region
      %s168 = ssub.s32 %s11, 1
      // Predicated region
      $region13: #{contextual_attention_forward.5} parent=11 // pred_check
        %p169 = pneg %p72
      $region14: #{contextual_attention_forward.5} parent=11 // pred_check_branch
        %171 = sbr.rel (%p169) target = $region16
      $region15: #{contextual_attention_forward.5} parent=11 // pred_region
        _
      $region16: #{contextual_attention_forward.5} parent=11 // pred_fallthru
        _
    $region12: #{contextual_attention_forward.5} parent=5 // pred_fallthru
      _
    %p172 = scmp.lt.s32.totalorder %s11, 2
    // Predicated region
    $region17: #{contextual_attention_forward.5} parent=5 // pred_check
      %p173 = pneg %p172
    $region18: #{contextual_attention_forward.5} parent=5 // pred_check_branch
      %175 = sbr.rel (%p173) target = $region20
    $region19: #{contextual_attention_forward.5} parent=5 // pred_region
      // Predicated region
      $region21: #{contextual_attention_forward.5} parent=19 // pred_check
        %p176 = pneg %p45
      $region22: #{contextual_attention_forward.5} parent=19 // pred_check_branch
        %178 = sbr.rel (%p176) target = $region24
      $region23: #{contextual_attention_forward.5} parent=19 // pred_region
        %s179 = smul.u32 8, %s19
        %p180 = scmp.lt.s32.totalorder %s18, 1
        %s181 = scalar_select %p180, %s18, 1
        %p182 = scmp.lt.s32.totalorder %s179, 7
        %s183 = scalar_select %p182, %s179, 7
        %s184 = smul.addr %s181, 8
        %s185 = sadd.s32 %s183, %s184
        %s186 = smul.addr %s185, 4
        %s187 = scalar_lea.vmem %s0, %s186
        %s188 = smul.u32 8, %s19
      $region24: #{contextual_attention_forward.5} parent=19 // pred_fallthru
        _
      // Predicated region
      $region25: #{contextual_attention_forward.5} parent=19 // pred_check
        %p189 = pneg %p92
      $region26: #{contextual_attention_forward.5} parent=19 // pred_check_branch
        %191 = sbr.rel (%p189) target = $region28
      $region27: #{contextual_attention_forward.5} parent=19 // pred_region
        %p192 = scmp.lt.s32.totalorder %s18, 1
        %s193 = scalar_select %p192, %s18, 1
        %s194 = smul.addr %s193, 8
        %s195 = smul.addr %s194, 4
        %s196 = scalar_lea.vmem %s2, %s195
      $region28: #{contextual_attention_forward.5} parent=19 // pred_fallthru
        _
    $region20: #{contextual_attention_forward.5} parent=5 // pred_fallthru
      _
    %p197 = scmp.le.s32.totalorder 1, %s11
    %p198 = scmp.lt.s32.totalorder %s11, 3
    %p199 = pnand %p197, %p198
    %p200 = pneg %p199
    // Predicated region
    $region29: #{contextual_attention_forward.5} parent=5 // pred_check
      _
    $region30: #{contextual_attention_forward.5} parent=5 // pred_check_branch
      %202 = sbr.rel (%p199) target = $region32
    $region31: #{contextual_attention_forward.5} parent=5 // pred_region
      %s203 = ssub.s32 %s11, 1
      %s204 = smul.u32 8, %s21
      %p205 = scmp.lt.s32.totalorder %s20, 1
      %s206 = scalar_select %p205, %s20, 1
      %p207 = scmp.lt.s32.totalorder %s204, 7
      %s208 = scalar_select %p207, %s204, 7
      %s209 = smul.addr %s206, 8
      %s210 = sadd.s32 %s208, %s209
      %s211 = smul.addr %s210, 4
      %s212 = scalar_lea.vmem %s0, %s211
      %p213 = pneg %p51
      %p214 = pneg %p48
      %p215 = pneg %p72
      %p216 = pneg %p69
      %p217 = scmp.lt.s32.totalorder %s20, 1
      %s218 = scalar_select %p217, %s20, 1
      %s219 = smul.addr %s218, 8
      %s220 = smul.addr %s219, 4
      %s221 = scalar_lea.vmem %s2, %s220
      %p222 = pneg %p98
      %p223 = pneg %p95
      %p224 = pneg %p126
      %p225 = pneg %p123
      %s226 = smul.u32 8, %s21
      %p227 = scmp.lt.s32.totalorder %s20, 1
      %s228 = scalar_select %p227, %s20, 1
      %p229 = scmp.lt.s32.totalorder %s226, 7
      %s230 = scalar_select %p229, %s226, 7
      %s231 = smul.addr %s228, 8
      %s232 = sadd.s32 %s230, %s231
      %s233 = smul.addr %s232, 4
      %s234 = scalar_lea.vmem %s3, %s233
      %p235 = pneg %p154
      %p236 = pneg %p151
      %s237 = smul.u32 8, %s21
      %p238 = scmp.lt.s32.totalorder %s20, 1
      %s239 = scalar_select %p238, %s20, 1
      %p240 = scmp.lt.s32.totalorder %s237, 7
      %s241 = scalar_select %p240, %s237, 7
      %s242 = smul.addr %s239, 8
      %s243 = sadd.s32 %s241, %s242
      %s244 = smul.addr %s243, 8
      %s245 = scalar_lea.vmem %s4, %s244
      %s246 = smul.u32 8, %s21
      %p247 = scmp.lt.s32.totalorder %s20, 1
      %s248 = scalar_select %p247, %s20, 1
      %p249 = scmp.lt.s32.totalorder %s246, 7
      %s250 = scalar_select %p249, %s246, 7
      %s251 = smul.addr %s248, 8
      %s252 = sadd.s32 %s250, %s251
      %s253 = smul.addr %s252, 4
      %s254 = scalar_lea.vmem %s0, %s253
      %s255 = smul.u32 8, %s21
      %p256 = scmp.lt.s32.totalorder %s20, 1
      %s257 = scalar_select %p256, %s20, 1
      %s258 = smul.addr %s257, 8
      %s259 = smul.addr %s258, 4
      %s260 = scalar_lea.vmem %s2, %s259
      %s261 = smul.u32 8, %s21
      %p262 = scmp.lt.s32.totalorder %s20, 1
      %s263 = scalar_select %p262, %s20, 1
      %p264 = scmp.lt.s32.totalorder %s261, 7
      %s265 = scalar_select %p264, %s261, 7
      %s266 = smul.addr %s263, 8
      %s267 = sadd.s32 %s265, %s266
      %s268 = smul.addr %s267, 4
      %s269 = scalar_lea.vmem %s3, %s268
      %s270 = smul.u32 8, %s21
      %s271 = smul.u32 8, %s21
      %p272 = scmp.lt.s32.totalorder %s20, 1
      %s273 = scalar_select %p272, %s20, 1
      %p274 = scmp.lt.s32.totalorder %s271, 7
      %s275 = scalar_select %p274, %s271, 7
      %s276 = smul.addr %s273, 8
      %s277 = sadd.s32 %s275, %s276
      %s278 = smul.addr %s277, 8
      %s279 = scalar_lea.vmem %s4, %s278
      %s280 = smul.u32 8, %s21
      %v282 = vld [vmem:[%s1] sm:$0x1]
      %v283 = vld [vmem:[%s254] sm:$0xf]
      %v284 = vld [vmem:[%s254 + $0x4] sm:$0xf]
      %v285 = vld [vmem:[%s254 + $0x8] sm:$0xf]
      %v286 = vld [vmem:[%s254 + $0xc] sm:$0xf]
      %v287 = vld [vmem:[%s254 + $0x10] sm:$0xf]
      %v288 = vld [vmem:[%s254 + $0x14] sm:$0xf]
      %v289 = vld [vmem:[%s254 + $0x18] sm:$0xf]
      %v290 = vld [vmem:[%s254 + $0x1c] sm:$0xf]
      %v291 = vunpack.c.l.bf16 %v283
      %v292 = vunpack.c.l.bf16 %v284
      %v293 = vunpack.c.l.bf16 %v285
      %v294 = vunpack.c.l.bf16 %v286
      %v295 = vunpack.c.l.bf16 %v287
      %v296 = vunpack.c.l.bf16 %v288
      %v297 = vunpack.c.l.bf16 %v289
      %v298 = vunpack.c.l.bf16 %v290
      %v300 = vlaneseq
      %v301 = vshrl.u32 %v300, 7
      %v302 = vsub.s32 0, %v301
      %v303 = vrot.slane %v282, %v302
      %v305 = vmul.f32 %v291, %v303
      %v306 = vmul.f32 %v292, %v303
      %v307 = vmul.f32 %v293, %v303
      %v308 = vmul.f32 %v294, %v303
      %v309 = vmul.f32 %v295, %v303
      %v310 = vmul.f32 %v296, %v303
      %v311 = vmul.f32 %v297, %v303
      %v312 = vmul.f32 %v298, %v303
      %v313 = vmul.f32 %v305, 10.0
      %v314 = vmul.f32 %v306, 10.0
      %v315 = vmul.f32 %v307, 10.0
      %v316 = vmul.f32 %v308, 10.0
      %v317 = vmul.f32 %v309, 10.0
      %v318 = vmul.f32 %v310, 10.0
      %v319 = vmul.f32 %v311, 10.0
      %v320 = vmul.f32 %v312, 10.0
      %vm321 = vcmask 523264
      %v322 = vsel %vm321, %v313, -inf
      %323 = vmax.xlane.f32.xlu0 %v322
      %v324 = vpop.xlane.xlu0 %323
      %v325 = vsel %vm321, %v314, -inf
      %326 = vmax.xlane.f32.xlu0 %v325
      %v327 = vpop.xlane.xlu0 %326
      %v328 = vsel %vm321, %v315, -inf
      %329 = vmax.xlane.f32.xlu0 %v328
      %v330 = vpop.xlane.xlu0 %329
      %v331 = vsel %vm321, %v316, -inf
      %332 = vmax.xlane.f32.xlu0 %v331
      %v333 = vpop.xlane.xlu0 %332
      %v334 = vsel %vm321, %v317, -inf
      %335 = vmax.xlane.f32.xlu0 %v334
      %v336 = vpop.xlane.xlu0 %335
      %v337 = vsel %vm321, %v318, -inf
      %338 = vmax.xlane.f32.xlu0 %v337
      %v339 = vpop.xlane.xlu0 %338
      %v340 = vsel %vm321, %v319, -inf
      %341 = vmax.xlane.f32.xlu0 %v340
      %v342 = vpop.xlane.xlu0 %341
      %v343 = vsel %vm321, %v320, -inf
      %344 = vmax.xlane.f32.xlu0 %v343
      %v345 = vpop.xlane.xlu0 %344
      %v346 = vsub.f32 %v313, %v324
      %v347 = vsub.f32 %v314, %v327
      %v348 = vsub.f32 %v315, %v330
      %v349 = vsub.f32 %v316, %v333
      %v350 = vsub.f32 %v317, %v336
      %v351 = vsub.f32 %v318, %v339
      %v352 = vsub.f32 %v319, %v342
      %v353 = vsub.f32 %v320, %v345
      %v354 = vmul.f32 %v346, 1.442695
      %v355 = vpow.pop %v354
      %v356 = vmul.f32 %v347, 1.442695
      %v357 = vpow.pop %v356
      %v358 = vmul.f32 %v348, 1.442695
      %v359 = vpow.pop %v358
      %v360 = vmul.f32 %v349, 1.442695
      %v361 = vpow.pop %v360
      %v362 = vmul.f32 %v350, 1.442695
      %v363 = vpow.pop %v362
      %v364 = vmul.f32 %v351, 1.442695
      %v365 = vpow.pop %v364
      %v366 = vmul.f32 %v352, 1.442695
      %v367 = vpow.pop %v366
      %v368 = vmul.f32 %v353, 1.442695
      %v369 = vpow.pop %v368
      %v370 = vmul.f32 %v355, %v303
      %v371 = vmul.f32 %v357, %v303
      %v372 = vmul.f32 %v359, %v303
      %v373 = vmul.f32 %v361, %v303
      %v374 = vmul.f32 %v363, %v303
      %v375 = vmul.f32 %v365, %v303
      %v376 = vmul.f32 %v367, %v303
      %v377 = vmul.f32 %v369, %v303
      %v378 = vsel %vm321, %v370, -inf
      %379 = vmax.xlane.f32.xlu0 %v378
      %v380 = vpop.xlane.xlu0 %379
      %v381 = vsel %vm321, %v371, -inf
      %382 = vmax.xlane.f32.xlu0 %v381
      %v383 = vpop.xlane.xlu0 %382
      %v384 = vsel %vm321, %v372, -inf
      %385 = vmax.xlane.f32.xlu0 %v384
      %v386 = vpop.xlane.xlu0 %385
      %v387 = vsel %vm321, %v373, -inf
      %388 = vmax.xlane.f32.xlu0 %v387
      %v389 = vpop.xlane.xlu0 %388
      %v390 = vsel %vm321, %v374, -inf
      %391 = vmax.xlane.f32.xlu0 %v390
      %v392 = vpop.xlane.xlu0 %391
      %v393 = vsel %vm321, %v375, -inf
      %394 = vmax.xlane.f32.xlu0 %v393
      %v395 = vpop.xlane.xlu0 %394
      %v396 = vsel %vm321, %v376, -inf
      %397 = vmax.xlane.f32.xlu0 %v396
      %v398 = vpop.xlane.xlu0 %397
      %v399 = vsel %vm321, %v377, -inf
      %400 = vmax.xlane.f32.xlu0 %v399
      %v401 = vpop.xlane.xlu0 %400
      %v402 = vlaneseq
      %v403 = vand.u32 %v402, 127
      %vm404 = vcmp.ge.f32.partialorder %v370, %v380
      %vm405 = vcmp.ge.f32.partialorder %v371, %v383
      %vm406 = vcmp.ge.f32.partialorder %v372, %v386
      %vm407 = vcmp.ge.f32.partialorder %v373, %v389
      %vm408 = vcmp.ge.f32.partialorder %v374, %v392
      %vm409 = vcmp.ge.f32.partialorder %v375, %v395
      %vm410 = vcmp.ge.f32.partialorder %v376, %v398
      %vm411 = vcmp.ge.f32.partialorder %v377, %v401
      %v412 = vsel %vm404, %v403, 64
      %v413 = vsel %vm405, %v403, 64
      %v414 = vsel %vm406, %v403, 64
      %v415 = vsel %vm407, %v403, 64
      %v416 = vsel %vm408, %v403, 64
      %v417 = vsel %vm409, %v403, 64
      %v418 = vsel %vm410, %v403, 64
      %v419 = vsel %vm411, %v403, 64
      %v420 = vsel %vm321, %v412, 2147483647
      %v421 = vand.u32 %v420, 65535
      %v422 = vshra.s32 %v420, 16
      %v423 = vcvt.s32.f32 %v421
      %v424 = vcvt.s32.f32 %v422
      %425 = vmin.xlane.f32.xlu0 %v424
      %v426 = vpop.xlane.xlu0 %425
      %vm427 = vcmp.eq.f32.partialorder %v424, %v426
      %v428 = vsel %vm427, %v423, inf
      %429 = vmin.xlane.f32.xlu0 %v428
      %v430 = vpop.xlane.xlu0 %429
      %v431 = vcvt.f32.s32 %v430
      %v432 = vcvt.f32.s32 %v426
      %v433 = vshll.u32 %v432, 16
      %v434 = vadd.s32 %v433, %v431
      %v435 = vsel %vm321, %v413, 2147483647
      %v436 = vand.u32 %v435, 65535
      %v437 = vshra.s32 %v435, 16
      %v438 = vcvt.s32.f32 %v436
      %v439 = vcvt.s32.f32 %v437
      %440 = vmin.xlane.f32.xlu0 %v439
      %v441 = vpop.xlane.xlu0 %440
      %vm442 = vcmp.eq.f32.partialorder %v439, %v441
      %v443 = vsel %vm442, %v438, inf
      %444 = vmin.xlane.f32.xlu0 %v443
      %v445 = vpop.xlane.xlu0 %444
      %v446 = vcvt.f32.s32 %v445
      %v447 = vcvt.f32.s32 %v441
      %v448 = vshll.u32 %v447, 16
      %v449 = vadd.s32 %v448, %v446
      %v450 = vsel %vm321, %v414, 2147483647
      %v451 = vand.u32 %v450, 65535
      %v452 = vshra.s32 %v450, 16
      %v453 = vcvt.s32.f32 %v451
      %v454 = vcvt.s32.f32 %v452
      %455 = vmin.xlane.f32.xlu0 %v454
      %v456 = vpop.xlane.xlu0 %455
      %vm457 = vcmp.eq.f32.partialorder %v454, %v456
      %v458 = vsel %vm457, %v453, inf
      %459 = vmin.xlane.f32.xlu0 %v458
      %v460 = vpop.xlane.xlu0 %459
      %v461 = vcvt.f32.s32 %v460
      %v462 = vcvt.f32.s32 %v456
      %v463 = vshll.u32 %v462, 16
      %v464 = vadd.s32 %v463, %v461
      %v465 = vsel %vm321, %v415, 2147483647
      %v466 = vand.u32 %v465, 65535
      %v467 = vshra.s32 %v465, 16
      %v468 = vcvt.s32.f32 %v466
      %v469 = vcvt.s32.f32 %v467
      %470 = vmin.xlane.f32.xlu0 %v469
      %v471 = vpop.xlane.xlu0 %470
      %vm472 = vcmp.eq.f32.partialorder %v469, %v471
      %v473 = vsel %vm472, %v468, inf
      %474 = vmin.xlane.f32.xlu0 %v473
      %v475 = vpop.xlane.xlu0 %474
      %v476 = vcvt.f32.s32 %v475
      %v477 = vcvt.f32.s32 %v471
      %v478 = vshll.u32 %v477, 16
      %v479 = vadd.s32 %v478, %v476
      %v480 = vsel %vm321, %v416, 2147483647
      %v481 = vand.u32 %v480, 65535
      %v482 = vshra.s32 %v480, 16
      %v483 = vcvt.s32.f32 %v481
      %v484 = vcvt.s32.f32 %v482
      %485 = vmin.xlane.f32.xlu0 %v484
      %v486 = vpop.xlane.xlu0 %485
      %vm487 = vcmp.eq.f32.partialorder %v484, %v486
      %v488 = vsel %vm487, %v483, inf
      %489 = vmin.xlane.f32.xlu0 %v488
      %v490 = vpop.xlane.xlu0 %489
      %v491 = vcvt.f32.s32 %v490
      %v492 = vcvt.f32.s32 %v486
      %v493 = vshll.u32 %v492, 16
      %v494 = vadd.s32 %v493, %v491
      %v495 = vsel %vm321, %v417, 2147483647
      %v496 = vand.u32 %v495, 65535
      %v497 = vshra.s32 %v495, 16
      %v498 = vcvt.s32.f32 %v496
      %v499 = vcvt.s32.f32 %v497
      %500 = vmin.xlane.f32.xlu0 %v499
      %v501 = vpop.xlane.xlu0 %500
      %vm502 = vcmp.eq.f32.partialorder %v499, %v501
      %v503 = vsel %vm502, %v498, inf
      %504 = vmin.xlane.f32.xlu0 %v503
      %v505 = vpop.xlane.xlu0 %504
      %v506 = vcvt.f32.s32 %v505
      %v507 = vcvt.f32.s32 %v501
      %v508 = vshll.u32 %v507, 16
      %v509 = vadd.s32 %v508, %v506
      %v510 = vsel %vm321, %v418, 2147483647
      %v511 = vand.u32 %v510, 65535
      %v512 = vshra.s32 %v510, 16
      %v513 = vcvt.s32.f32 %v511
      %v514 = vcvt.s32.f32 %v512
      %515 = vmin.xlane.f32.xlu0 %v514
      %v516 = vpop.xlane.xlu0 %515
      %vm517 = vcmp.eq.f32.partialorder %v514, %v516
      %v518 = vsel %vm517, %v513, inf
      %519 = vmin.xlane.f32.xlu0 %v518
      %v520 = vpop.xlane.xlu0 %519
      %v521 = vcvt.f32.s32 %v520
      %v522 = vcvt.f32.s32 %v516
      %v523 = vshll.u32 %v522, 16
      %v524 = vadd.s32 %v523, %v521
      %v525 = vsel %vm321, %v419, 2147483647
      %v526 = vand.u32 %v525, 65535
      %v527 = vshra.s32 %v525, 16
      %v528 = vcvt.s32.f32 %v526
      %v529 = vcvt.s32.f32 %v527
      %530 = vmin.xlane.f32.xlu0 %v529
      %v531 = vpop.xlane.xlu0 %530
      %vm532 = vcmp.eq.f32.partialorder %v529, %v531
      %v533 = vsel %vm532, %v528, inf
      %534 = vmin.xlane.f32.xlu0 %v533
      %v535 = vpop.xlane.xlu0 %534
      %v536 = vcvt.f32.s32 %v535
      %v537 = vcvt.f32.s32 %v531
      %v538 = vshll.u32 %v537, 16
      %v539 = vadd.s32 %v538, %v536
      %vm540 = vcmask 7168
      %541 = vst.msk [vmem:[%s279] sm:$0xff] %vm540, %v434
      %542 = vst.msk [vmem:[%s279 + $0x8] sm:$0xff] %vm540, %v449
      %543 = vst.msk [vmem:[%s279 + $0x10] sm:$0xff] %vm540, %v464
      %544 = vst.msk [vmem:[%s279 + $0x18] sm:$0xff] %vm540, %v479
      %545 = vst.msk [vmem:[%s279 + $0x20] sm:$0xff] %vm540, %v494
      %546 = vst.msk [vmem:[%s279 + $0x28] sm:$0xff] %vm540, %v509
      %547 = vst.msk [vmem:[%s279 + $0x30] sm:$0xff] %vm540, %v524
      %548 = vst.msk [vmem:[%s279 + $0x38] sm:$0xff] %vm540, %v539
      %v549 = vsel %vm321, %v355, 0.0
      %550 = vadd.xlane.f32.xlu0 %v549
      %v551 = vpop.xlane.xlu0 %550
      %v552 = vsel %vm321, %v357, 0.0
      %553 = vadd.xlane.f32.xlu0 %v552
      %v554 = vpop.xlane.xlu0 %553
      %v555 = vsel %vm321, %v359, 0.0
      %556 = vadd.xlane.f32.xlu0 %v555
      %v557 = vpop.xlane.xlu0 %556
      %v558 = vsel %vm321, %v361, 0.0
      %559 = vadd.xlane.f32.xlu0 %v558
      %v560 = vpop.xlane.xlu0 %559
      %v561 = vsel %vm321, %v363, 0.0
      %562 = vadd.xlane.f32.xlu0 %v561
      %v563 = vpop.xlane.xlu0 %562
      %v564 = vsel %vm321, %v365, 0.0
      %565 = vadd.xlane.f32.xlu0 %v564
      %v566 = vpop.xlane.xlu0 %565
      %v567 = vsel %vm321, %v367, 0.0
      %568 = vadd.xlane.f32.xlu0 %v567
      %v569 = vpop.xlane.xlu0 %568
      %v570 = vsel %vm321, %v369, 0.0
      %571 = vadd.xlane.f32.xlu0 %v570
      %v572 = vpop.xlane.xlu0 %571
      %v573 = vrcp.pop %v551
      %v574 = vrcp.pop %v554
      %v575 = vrcp.pop %v557
      %v576 = vrcp.pop %v560
      %v577 = vrcp.pop %v563
      %v578 = vrcp.pop %v566
      %v579 = vrcp.pop %v569
      %v580 = vrcp.pop %v572
      %v581 = vmul.f32 %v370, %v573
      %v582 = vmul.f32 %v371, %v574
      %v583 = vmul.f32 %v372, %v575
      %v584 = vmul.f32 %v373, %v576
      %v585 = vmul.f32 %v374, %v577
      %v586 = vmul.f32 %v375, %v578
      %v587 = vmul.f32 %v376, %v579
      %v588 = vmul.f32 %v377, %v580
      %v589 = vpack.c.bf16 %v582, %v581
      %v590 = vpack.c.bf16 %v584, %v583
      %v591 = vpack.c.bf16 %v586, %v585
      %v592 = vpack.c.bf16 %v588, %v587
      %v593 = vld [vmem:[%s260] sm:$0xf]
      %v594 = vld [vmem:[%s260 + $0x4] sm:$0xf]
      %v595 = vld [vmem:[%s260 + $0x8] sm:$0xf]
      %v596 = vld [vmem:[%s260 + $0xc] sm:$0xf]
      %v597 = vld [vmem:[%s260 + $0x10] sm:$0xf]
      %v598 = vld [vmem:[%s260 + $0x14] sm:$0xf]
      %v599 = vld [vmem:[%s260 + $0x18] sm:$0xf]
      %v600 = vld [vmem:[%s260 + $0x1c] sm:$0xf]
      %v609 = vunpack.c.l.b16 %v593
      %v610 = vunpack.c.l.b16 %v594
      %v611 = vunpack.c.l.b16 %v595
      %v612 = vunpack.c.l.b16 %v596
      %v613 = vunpack.c.l.b16 %v597
      %v614 = vunpack.c.l.b16 %v598
      %v615 = vunpack.c.l.b16 %v599
      %v616 = vunpack.c.l.b16 %v600
      %v617 = vpack.c.b16 %v610, %v609
      %v618 = vpack.c.b16 %v612, %v611
      %v619 = vpack.c.b16 %v614, %v613
      %v620 = vpack.c.b16 %v616, %v615
      %v626 = vsel %vm321, %v589, 0
      %v629 = vsel %vm321, %v590, 0
      %v632 = vsel %vm321, %v591, 0
      %v635 = vsel %vm321, %v592, 0
      %637 = vmatprep.subr.bf16.mxu0 0
      %638 = vmatpush1.bf16.msra.mxu0 0
      %639 = vmatprep.subr.bf16.mxu0 0
      %640 = vmatpush1.bf16.msra.mxu0 0
      %641 = vmatprep.subr.bf16.mxu0 0
      %642 = vmatpush1.bf16.msra.mxu0 0
      %643 = vmatprep.subr.bf16.mxu0 0
      %644 = vmatpush1.bf16.msra.mxu0 0
      %645 = vmatprep.subr.bf16.mxu0 0
      %646 = vmatpush1.bf16.msra.mxu0 %v620
      %647 = vmatprep.subr.bf16.mxu0 0
      %648 = vmatpush1.bf16.msra.mxu0 %v619
      %649 = vmatprep.subr.bf16.mxu0 0
      %650 = vmatpush1.bf16.msra.mxu0 %v618
      %651 = vmatprep.subr.bf16.mxu0 0
      %652 = vmatpush1.bf16.msra.mxu0 %v617
      %653 = vmatprep.subr.bf16.mxu0 0
      %654 = vmatpush2.bf16.msra.mxu0 0
      %655 = vmatprep.subr.bf16.mxu0 0
      %656 = vmatpush2.bf16.msra.mxu0 0
      %657 = vmatprep.subr.bf16.mxu0 0
      %658 = vmatpush2.bf16.msra.mxu0 0
      %659 = vmatprep.subr.bf16.mxu0 0
      %660 = vmatpush2.bf16.msra.mxu0 0
      %661 = vmatprep.subr.bf16.mxu0 0
      %662 = vmatpush2.bf16.msra.mxu0 0
      %663 = vmatprep.subr.bf16.mxu0 0
      %664 = vmatpush2.bf16.msra.mxu0 0
      %665 = vmatprep.subr.bf16.mxu0 0
      %666 = vmatpush2.bf16.msra.mxu0 0
      %667 = vmatprep.subr.bf16.mxu0 0
      %668 = vmatpush2.bf16.msra.mxu0 0
      %669 = vmatprep.mubr.bf16.mxu0 0
      %670 = vmatmul.mubr.bf16.gmra.mxu0 %v626
      %v671 = vpop.f32.mrf.mxu0
      %v672 = vadd.f32 0.0, %v671
      %v673 = vpop.f32.mrf.mxu0
      %v674 = vpop.f32.mrf.mxu0
      %v675 = vadd.f32 0.0, %v674
      %v676 = vpop.f32.mrf.mxu0
      %677 = vmatprep.mubr.bf16.mxu0 0
      %678 = vmatmul.mubr.bf16.gmra.mxu0 %v629
      %v679 = vpop.f32.mrf.mxu0
      %v680 = vadd.f32 0.0, %v679
      %v681 = vpop.f32.mrf.mxu0
      %v682 = vpop.f32.mrf.mxu0
      %v683 = vadd.f32 0.0, %v682
      %v684 = vpop.f32.mrf.mxu0
      %685 = vmatprep.mubr.bf16.mxu0 0
      %686 = vmatmul.mubr.bf16.gmra.mxu0 %v632
      %v687 = vpop.f32.mrf.mxu0
      %v688 = vadd.f32 0.0, %v687
      %v689 = vpop.f32.mrf.mxu0
      %v690 = vpop.f32.mrf.mxu0
      %v691 = vadd.f32 0.0, %v690
      %v692 = vpop.f32.mrf.mxu0
      %693 = vmatprep.mubr.bf16.mxu0 0
      %694 = vmatmul.mubr.bf16.gmra.mxu0 %v635
      %v695 = vpop.f32.mrf.mxu0
      %v696 = vadd.f32 0.0, %v695
      %v697 = vpop.f32.mrf.mxu0
      %v698 = vpop.f32.mrf.mxu0
      %v699 = vadd.f32 0.0, %v698
      %v700 = vpop.f32.mrf.mxu0
      %701 = vdwg.mxu0
      %v702 = vmul.f32 %v672, 0.25
      %v703 = vmul.f32 %v675, 0.25
      %v704 = vmul.f32 %v680, 0.25
      %v705 = vmul.f32 %v683, 0.25
      %v706 = vmul.f32 %v688, 0.25
      %v707 = vmul.f32 %v691, 0.25
      %v708 = vmul.f32 %v696, 0.25
      %v709 = vmul.f32 %v699, 0.25
      %v710 = vpack.c.bf16 %v703, %v702
      %v711 = vpack.c.bf16 %v705, %v704
      %v712 = vpack.c.bf16 %v707, %v706
      %v713 = vpack.c.bf16 %v709, %v708
      %v718 = vunpack.c.l.b16 %v710
      %v719 = vunpack.c.h.b16 %v710
      %v720 = vunpack.c.l.b16 %v711
      %v721 = vunpack.c.h.b16 %v711
      %v722 = vunpack.c.l.b16 %v712
      %v723 = vunpack.c.h.b16 %v712
      %v724 = vunpack.c.l.b16 %v713
      %v725 = vunpack.c.h.b16 %v713
      %v726 = vpack.c.b16 %v718, %v718
      %v727 = vpack.c.b16 %v719, %v719
      %v728 = vpack.c.b16 %v720, %v720
      %v729 = vpack.c.b16 %v721, %v721
      %v730 = vpack.c.b16 %v722, %v722
      %v731 = vpack.c.b16 %v723, %v723
      %v732 = vpack.c.b16 %v724, %v724
      %v733 = vpack.c.b16 %v725, %v725
      %742 = vst [vmem:[%s269] sm:$0xf] %v726
      %743 = vst [vmem:[%s269 + $0x4] sm:$0xf] %v727
      %744 = vst [vmem:[%s269 + $0x8] sm:$0xf] %v728
      %745 = vst [vmem:[%s269 + $0xc] sm:$0xf] %v729
      %746 = vst [vmem:[%s269 + $0x10] sm:$0xf] %v730
      %747 = vst [vmem:[%s269 + $0x14] sm:$0xf] %v731
      %748 = vst [vmem:[%s269 + $0x18] sm:$0xf] %v732
      %749 = vst [vmem:[%s269 + $0x1c] sm:$0xf] %v733
      %s750 = smul.u32 8, %s21
      %p751 = scmp.lt.s32.totalorder %s20, 1
      %s752 = scalar_select %p751, %s20, 1
      %p753 = scmp.lt.s32.totalorder %s750, 7
      %s754 = scalar_select %p753, %s750, 7
      %s755 = smul.addr %s752, 8
      %s756 = sadd.s32 %s754, %s755
      %s757 = smul.addr %s756, 4
      %s758 = scalar_lea.vmem %s3, %s757
      %s759 = smul.u32 8, %s21
      %p760 = scmp.lt.s32.totalorder %s20, 1
      %s761 = scalar_select %p760, %s20, 1
      %p762 = scmp.lt.s32.totalorder %s759, 7
      %s763 = scalar_select %p762, %s759, 7
      %s764 = smul.addr %s761, 8
      %s765 = sadd.s32 %s763, %s764
      %s766 = smul.addr %s765, 8
      %s767 = scalar_lea.vmem %s4, %s766
      // Predicated region
      $region33: #{contextual_attention_forward.5} parent=31 // pred_check
        %p768 = pneg %p123
      $region34: #{contextual_attention_forward.5} parent=31 // pred_check_branch
        %770 = sbr.rel (%p768) target = $region36
      $region35: #{contextual_attention_forward.5} parent=31 // pred_region
        %s771 = smul.u32 8, %s21
      $region36: #{contextual_attention_forward.5} parent=31 // pred_fallthru
        _
      // Predicated region
      $region37: #{contextual_attention_forward.5} parent=31 // pred_check
        %p772 = pneg %p151
      $region38: #{contextual_attention_forward.5} parent=31 // pred_check_branch
        %774 = sbr.rel (%p772) target = $region40
      $region39: #{contextual_attention_forward.5} parent=31 // pred_region
        %s775 = smul.u32 8, %s21
      $region40: #{contextual_attention_forward.5} parent=31 // pred_fallthru
        _
    $region32: #{contextual_attention_forward.5} parent=5 // pred_fallthru
      _
    %p776 = scmp.le.s32.totalorder 2, %s11
    // Predicated region
    $region41: #{contextual_attention_forward.5} parent=5 // pred_check
      %p777 = pneg %p776
    $region42: #{contextual_attention_forward.5} parent=5 // pred_check_branch
      %779 = sbr.rel (%p777) target = $region44
    $region43: #{contextual_attention_forward.5} parent=5 // pred_region
      %s780 = ssub.s32 %s11, 2
      // Predicated region
      $region45: #{contextual_attention_forward.5} parent=43 // pred_check
        %p781 = pneg %p129
      $region46: #{contextual_attention_forward.5} parent=43 // pred_check_branch
        %783 = sbr.rel (%p781) target = $region48
      $region47: #{contextual_attention_forward.5} parent=43 // pred_region
        %s784 = smul.u32 8, %s23
        %p785 = scmp.lt.s32.totalorder %s22, 1
        %s786 = scalar_select %p785, %s22, 1
        %p787 = scmp.lt.s32.totalorder %s784, 7
        %s788 = scalar_select %p787, %s784, 7
        %s789 = smul.addr %s786, 8
        %s790 = sadd.s32 %s788, %s789
        %s791 = smul.addr %s790, 4
        %s792 = scalar_lea.vmem %s3, %s791
      $region48: #{contextual_attention_forward.5} parent=43 // pred_fallthru
        _
      // Predicated region
      $region49: #{contextual_attention_forward.5} parent=43 // pred_check
        %p793 = pneg %p157
      $region50: #{contextual_attention_forward.5} parent=43 // pred_check_branch
        %795 = sbr.rel (%p793) target = $region52
      $region51: #{contextual_attention_forward.5} parent=43 // pred_region
        %s796 = smul.u32 8, %s23
        %p797 = scmp.lt.s32.totalorder %s22, 1
        %s798 = scalar_select %p797, %s22, 1
        %p799 = scmp.lt.s32.totalorder %s796, 7
        %s800 = scalar_select %p799, %s796, 7
        %s801 = smul.addr %s798, 8
        %s802 = sadd.s32 %s800, %s801
        %s803 = smul.addr %s802, 8
        %s804 = scalar_lea.vmem %s4, %s803
      $region52: #{contextual_attention_forward.5} parent=43 // pred_fallthru
        _
    $region44: #{contextual_attention_forward.5} parent=5 // pred_fallthru
      _
  $region6: #{contextual_attention_forward.5} parent=0 // loop_footer
    %s15 = sadd.s32 1, %s11
  $region7: #{contextual_attention_forward.5} parent=0 // loop_footer_branch
    %10 = sbr.rel target = $region3
  $region8: #{contextual_attention_forward.5} parent=0 // loop_exit
    _

// kernel: contextual_attention_forward.6
$region0: #{contextual_attention_forward.6}
  #allocation0 [shape = 'u32[]', space=smem, size = 0x4, offset = 0x4, fixed_abs, tag = 'smem constant byte address 0x4 - core index']
  #allocation1 [shape = 'u32[144,128]{1,0:T(1,128)}', space=vmem, size = 0x12000, scoped, tag = 'internal scratch']
  %s0 = inlined_call_operand.vmem [shape: bf16[4,128], index: 0, kind: input, shape index: {}]
  %s1 = inlined_call_operand.vmem [shape: bf16[2,128,256], index: 1, kind: input, shape index: {}]
  %s2 = inlined_call_operand.vmem [shape: f32[4,1], index: 2, kind: input, shape index: {}]
  %s3 = inlined_call_operand.vmem [shape: bf16[2,4,256], index: 3, kind: output, shape index: {}]
  %s4 = sld [smem:[#allocation0]]
  $region45: #{contextual_attention_forward.6} parent=0
    _
  %s6 = ssub.s32 1, %s4
  %s7 = scalar_select 0, %s6, %s4
  loop: start=0, step=1, limit=4
  $region2: #{contextual_attention_forward.6} parent=0 // loop_pre_header
    _
  $region3: #{contextual_attention_forward.6} parent=0 // loop_header
    %s9 = sphi 0, %s13
    %p10 = scmp.ge.s32.totalorder %s9, 4
    %s16 = sphi 0, %s28
    %s17 = sphi 0, %s24
    %s18 = sphi 0, %s16
    %s19 = sphi 0, %s17
    %s20 = sphi 0, %s18
    %s21 = sphi 0, %s19
    %s29 = sphi 0, %s29
    %s31 = sphi 0, %s29
    %s32 = sphi 0, %s31
    %s46 = sphi 0, %s32
    %s54 = sphi 0, %s56
    %s57 = sphi 0, %s54
    %s58 = sphi 0, %s57
    %s74 = sphi 0, %s58
    %s78 = sphi 0, %s78
    %s80 = sphi 0, %s78
    %s81 = sphi 0, %s80
    %s95 = sphi 0, %s81
    %s103 = sphi 0, %s105
    %s106 = sphi 0, %s103
    %s107 = sphi 0, %s106
    %s123 = sphi 0, %s107
  $region4: #{contextual_attention_forward.6} parent=0 // loop_header_branch
    %12 = sbr.rel (%p10) target = $region8
  $region5: #{contextual_attention_forward.6} parent=0 // loop_body
    %s14 = ssub.s32 %s9, 1
    %s15 = ssub.s32 %s9, 2
    %s22 = sadd.s32 1, %s17
    %p23 = scmp.ge.s32.totalorder %s22, 1
    %s24 = scalar_select %p23, 0, %s22
    %s25 = sadd.s32 1, %s16
    %s26 = scalar_select %p23, %s25, %s16
    %p27 = scmp.ge.s32.totalorder %s26, 2
    %s28 = scalar_select %p27, 0, %s26
    %s30 = sadd.s32 %s29, 1
    %p33 = scmp.eq.s32.totalorder %s9, 1
    %p34 = scmp.ne.s32.totalorder %s29, %s31
    %p35 = scmp.eq.s32.totalorder %s9, 0
    %p36 = por %p34, %p35
    %p37 = scmp.ne.s32.totalorder %s29, %s31
    %p38 = scmp.eq.s32.totalorder %s14, 1
    %p39 = por %p37, %p38
    %p40 = scmp.ne.s32.totalorder %s31, %s32
    %p41 = scmp.eq.s32.totalorder %s14, 0
    %p42 = por %p40, %p41
    %p43 = scmp.ne.s32.totalorder %s31, %s32
    %p44 = scmp.eq.s32.totalorder %s15, 1
    %p45 = por %p43, %p44
    %p47 = scmp.ne.s32.totalorder %s32, %s46
    %p48 = scmp.eq.s32.totalorder %s15, 0
    %p49 = por %p47, %p48
    %s50 = ssub.s32 %s16, %s28
    %s51 = ssub.s32 %s17, %s24
    %s52 = sor.u32 %s50, %s51
    %p53 = scmp.eq.s32.totalorder %s52, 0
    %s55 = sadd.s32 %s54, 1
    %s56 = scalar_select %p53, %s54, %s55
    %p59 = pneg %p53
    %p60 = scmp.eq.s32.totalorder %s9, 1
    %p61 = por %p59, %p60
    %p62 = scmp.ne.s32.totalorder %s54, %s57
    %p63 = scmp.eq.s32.totalorder %s9, 0
    %p64 = por %p62, %p63
    %p65 = scmp.ne.s32.totalorder %s54, %s57
    %p66 = scmp.eq.s32.totalorder %s14, 1
    %p67 = por %p65, %p66
    %p68 = scmp.ne.s32.totalorder %s57, %s58
    %p69 = scmp.eq.s32.totalorder %s14, 0
    %p70 = por %p68, %p69
    %p71 = scmp.ne.s32.totalorder %s57, %s58
    %p72 = scmp.eq.s32.totalorder %s15, 1
    %p73 = por %p71, %p72
    %p75 = scmp.ne.s32.totalorder %s58, %s74
    %p76 = scmp.eq.s32.totalorder %s15, 0
    %p77 = por %p75, %p76
    %s79 = sadd.s32 %s78, 1
    %p82 = scmp.eq.s32.totalorder %s9, 1
    %p83 = scmp.ne.s32.totalorder %s78, %s80
    %p84 = scmp.eq.s32.totalorder %s9, 0
    %p85 = por %p83, %p84
    %p86 = scmp.ne.s32.totalorder %s78, %s80
    %p87 = scmp.eq.s32.totalorder %s14, 1
    %p88 = por %p86, %p87
    %p89 = scmp.ne.s32.totalorder %s80, %s81
    %p90 = scmp.eq.s32.totalorder %s14, 0
    %p91 = por %p89, %p90
    %p92 = scmp.ne.s32.totalorder %s80, %s81
    %p93 = scmp.eq.s32.totalorder %s15, 1
    %p94 = por %p92, %p93
    %p96 = scmp.ne.s32.totalorder %s81, %s95
    %p97 = scmp.eq.s32.totalorder %s15, 0
    %p98 = por %p96, %p97
    %s99 = ssub.s32 %s16, %s28
    %s100 = ssub.s32 %s17, %s24
    %s101 = sor.u32 %s99, %s100
    %p102 = scmp.eq.s32.totalorder %s101, 0
    %s104 = sadd.s32 %s103, 1
    %s105 = scalar_select %p102, %s103, %s104
    %p108 = pneg %p102
    %p109 = scmp.eq.s32.totalorder %s9, 1
    %p110 = por %p108, %p109
    %p111 = scmp.ne.s32.totalorder %s103, %s106
    %p112 = scmp.eq.s32.totalorder %s9, 0
    %p113 = por %p111, %p112
    %p114 = scmp.ne.s32.totalorder %s103, %s106
    %p115 = scmp.eq.s32.totalorder %s14, 1
    %p116 = por %p114, %p115
    %p117 = scmp.ne.s32.totalorder %s106, %s107
    %p118 = scmp.eq.s32.totalorder %s14, 0
    %p119 = por %p117, %p118
    %p120 = scmp.ne.s32.totalorder %s106, %s107
    %p121 = scmp.eq.s32.totalorder %s15, 1
    %p122 = por %p120, %p121
    %p124 = scmp.ne.s32.totalorder %s107, %s123
    %p125 = scmp.eq.s32.totalorder %s15, 0
    %p126 = por %p124, %p125
    %p127 = scmp.le.s32.totalorder 1, %s9
    %p128 = scmp.lt.s32.totalorder %s9, 3
    %p129 = pnand %p127, %p128
    %p130 = pneg %p129
    // Predicated region
    $region9: #{contextual_attention_forward.6} parent=5 // pred_check
      _
    $region10: #{contextual_attention_forward.6} parent=5 // pred_check_branch
      %132 = sbr.rel (%p129) target = $region12
    $region11: #{contextual_attention_forward.6} parent=5 // pred_region
      %s133 = ssub.s32 %s9, 1
      // Predicated region
      $region13: #{contextual_attention_forward.6} parent=11 // pred_check
        %p134 = pneg %p42
      $region14: #{contextual_attention_forward.6} parent=11 // pred_check_branch
        %136 = sbr.rel (%p134) target = $region16
      $region15: #{contextual_attention_forward.6} parent=11 // pred_region
        _
      $region16: #{contextual_attention_forward.6} parent=11 // pred_fallthru
        _
      // Predicated region
      $region17: #{contextual_attention_forward.6} parent=11 // pred_check
        %p137 = pneg %p91
      $region18: #{contextual_attention_forward.6} parent=11 // pred_check_branch
        %139 = sbr.rel (%p137) target = $region20
      $region19: #{contextual_attention_forward.6} parent=11 // pred_region
        _
      $region20: #{contextual_attention_forward.6} parent=11 // pred_fallthru
        _
    $region12: #{contextual_attention_forward.6} parent=5 // pred_fallthru
      _
    %p140 = scmp.lt.s32.totalorder %s9, 2
    // Predicated region
    $region21: #{contextual_attention_forward.6} parent=5 // pred_check
      %p141 = pneg %p140
    $region22: #{contextual_attention_forward.6} parent=5 // pred_check_branch
      %143 = sbr.rel (%p141) target = $region24
    $region23: #{contextual_attention_forward.6} parent=5 // pred_region
      // Predicated region
      $region25: #{contextual_attention_forward.6} parent=23 // pred_check
        %p144 = pneg %p64
      $region26: #{contextual_attention_forward.6} parent=23 // pred_check_branch
        %146 = sbr.rel (%p144) target = $region28
      $region27: #{contextual_attention_forward.6} parent=23 // pred_region
        %s147 = smul.u32 2, %s17
        %p148 = scmp.lt.s32.totalorder %s16, 1
        %s149 = scalar_select %p148, %s16, 1
        %p150 = scmp.lt.s32.totalorder %s147, 1
        %s151 = scalar_select %p150, %s147, 1
        %s152 = smul.addr %s149, 32
        %s153 = sadd.s32 %s151, %s152
        %s154 = smul.addr %s153, 4
        %s155 = scalar_lea.vmem %s1, %s154
        %s156 = smul.u32 2, %s17
      $region28: #{contextual_attention_forward.6} parent=23 // pred_fallthru
        _
    $region24: #{contextual_attention_forward.6} parent=5 // pred_fallthru
      _
    %p157 = scmp.le.s32.totalorder 1, %s9
    %p158 = scmp.lt.s32.totalorder %s9, 3
    %p159 = pnand %p157, %p158
    %p160 = pneg %p159
    // Predicated region
    $region29: #{contextual_attention_forward.6} parent=5 // pred_check
      _
    $region30: #{contextual_attention_forward.6} parent=5 // pred_check_branch
      %162 = sbr.rel (%p159) target = $region32
    $region31: #{contextual_attention_forward.6} parent=5 // pred_region
      %s163 = ssub.s32 %s9, 1
      %p164 = pneg %p42
      %p165 = pneg %p39
      %s166 = smul.u32 2, %s19
      %p167 = scmp.lt.s32.totalorder %s18, 1
      %s168 = scalar_select %p167, %s18, 1
      %p169 = scmp.lt.s32.totalorder %s166, 1
      %s170 = scalar_select %p169, %s166, 1
      %s171 = smul.addr %s168, 32
      %s172 = sadd.s32 %s170, %s171
      %s173 = smul.addr %s172, 4
      %s174 = scalar_lea.vmem %s1, %s173
      %p175 = pneg %p70
      %p176 = pneg %p67
      %p177 = pneg %p91
      %p178 = pneg %p88
      %p179 = pneg %p119
      %p180 = pneg %p116
      %s181 = smul.u32 2, %s19
      %p182 = scmp.lt.s32.totalorder %s18, 1
      %s183 = scalar_select %p182, %s18, 1
      %p184 = scmp.lt.s32.totalorder %s181, 1
      %s185 = scalar_select %p184, %s181, 1
      %s186 = smul.addr %s183, 2
      %s187 = sadd.s32 %s185, %s186
      %s188 = smul.addr %s187, 2
      %s189 = scalar_lea.vmem %s3, %s188
      %s190 = smul.u32 2, %s19
      %p191 = scmp.lt.s32.totalorder %s18, 1
      %s192 = scalar_select %p191, %s18, 1
      %p193 = scmp.lt.s32.totalorder %s190, 1
      %s194 = scalar_select %p193, %s190, 1
      %s195 = smul.addr %s192, 32
      %s196 = sadd.s32 %s194, %s195
      %s197 = smul.addr %s196, 4
      %s198 = scalar_lea.vmem %s1, %s197
      %s199 = smul.u32 2, %s19
      %s200 = smul.u32 2, %s19
      %p201 = scmp.lt.s32.totalorder %s18, 1
      %s202 = scalar_select %p201, %s18, 1
      %p203 = scmp.lt.s32.totalorder %s200, 1
      %s204 = scalar_select %p203, %s200, 1
      %s205 = smul.addr %s202, 2
      %s206 = sadd.s32 %s204, %s205
      %s207 = smul.addr %s206, 2
      %s208 = scalar_lea.vmem %s3, %s207
      %s209 = smul.u32 2, %s19
      %v211 = vld [vmem:[%s0] sm:$0x3]
      %v212 = vld [vmem:[%s198] sm:$0xff]
      %v213 = vld [vmem:[%s198 + $0x8] sm:$0xff]
      %v214 = vld [vmem:[%s198 + $0x10] sm:$0xff]
      %v215 = vld [vmem:[%s198 + $0x18] sm:$0xff]
      %v216 = vld [vmem:[%s198 + $0x20] sm:$0xff]
      %v217 = vld [vmem:[%s198 + $0x28] sm:$0xff]
      %v218 = vld [vmem:[%s198 + $0x30] sm:$0xff]
      %v219 = vld [vmem:[%s198 + $0x38] sm:$0xff]
      %v220 = vld [vmem:[%s198 + $0x40] sm:$0xff]
      %v221 = vld [vmem:[%s198 + $0x48] sm:$0xff]
      %v222 = vld [vmem:[%s198 + $0x50] sm:$0xff]
      %v223 = vld [vmem:[%s198 + $0x58] sm:$0xff]
      %v224 = vld [vmem:[%s198 + $0x60] sm:$0xff]
      %v225 = vld [vmem:[%s198 + $0x68] sm:$0xff]
      %v226 = vld [vmem:[%s198 + $0x70] sm:$0xff]
      %v227 = vld [vmem:[%s198 + $0x78] sm:$0xff]
      %v228 = vld [vmem:[%s2] sm:$0xf]
      %230 = vset.pattern.permute.xlu0 0
      %231 = vperm.xlu0 %230, %v228
      %v232 = vpop.permute.xlu0 %231
      %v250 = vunpack.c.l.b16 %v212
      %v251 = vunpack.c.h.b16 %v212
      %v252 = vunpack.c.l.b16 %v213
      %v253 = vunpack.c.h.b16 %v213
      %v254 = vunpack.c.l.b16 %v214
      %v255 = vunpack.c.h.b16 %v214
      %v256 = vunpack.c.l.b16 %v215
      %v257 = vunpack.c.h.b16 %v215
      %v258 = vunpack.c.l.b16 %v216
      %v259 = vunpack.c.h.b16 %v216
      %v260 = vunpack.c.l.b16 %v217
      %v261 = vunpack.c.h.b16 %v217
      %v262 = vunpack.c.l.b16 %v218
      %v263 = vunpack.c.h.b16 %v218
      %v264 = vunpack.c.l.b16 %v219
      %v265 = vunpack.c.h.b16 %v219
      %v266 = vunpack.c.l.b16 %v220
      %v267 = vunpack.c.h.b16 %v220
      %v268 = vunpack.c.l.b16 %v221
      %v269 = vunpack.c.h.b16 %v221
      %v270 = vunpack.c.l.b16 %v222
      %v271 = vunpack.c.h.b16 %v222
      %v272 = vunpack.c.l.b16 %v223
      %v273 = vunpack.c.h.b16 %v223
      %v274 = vunpack.c.l.b16 %v224
      %v275 = vunpack.c.h.b16 %v224
      %v276 = vunpack.c.l.b16 %v225
      %v277 = vunpack.c.h.b16 %v225
      %v278 = vunpack.c.l.b16 %v226
      %v279 = vunpack.c.h.b16 %v226
      %v280 = vunpack.c.l.b16 %v227
      %v281 = vunpack.c.h.b16 %v227
      %v282 = vpack.c.b16 %v252, %v250
      %v283 = vpack.c.b16 %v253, %v251
      %v284 = vpack.c.b16 %v256, %v254
      %v285 = vpack.c.b16 %v257, %v255
      %v286 = vpack.c.b16 %v260, %v258
      %v287 = vpack.c.b16 %v261, %v259
      %v288 = vpack.c.b16 %v264, %v262
      %v289 = vpack.c.b16 %v265, %v263
      %v290 = vpack.c.b16 %v268, %v266
      %v291 = vpack.c.b16 %v269, %v267
      %v292 = vpack.c.b16 %v272, %v270
      %v293 = vpack.c.b16 %v273, %v271
      %v294 = vpack.c.b16 %v276, %v274
      %v295 = vpack.c.b16 %v277, %v275
      %v296 = vpack.c.b16 %v280, %v278
      %v297 = vpack.c.b16 %v281, %v279
      %314 = vmatprep.subr.bf16.mxu0 %v297
      %315 = vmatpush1.bf16.msra.mxu0 %v296
      %316 = vmatprep.subr.bf16.mxu0 %v295
      %317 = vmatpush1.bf16.msra.mxu0 %v294
      %318 = vmatprep.subr.bf16.mxu0 %v293
      %319 = vmatpush1.bf16.msra.mxu0 %v292
      %320 = vmatprep.subr.bf16.mxu0 %v291
      %321 = vmatpush1.bf16.msra.mxu0 %v290
      %322 = vmatprep.subr.bf16.mxu0 %v289
      %323 = vmatpush1.bf16.msra.mxu0 %v288
      %324 = vmatprep.subr.bf16.mxu0 %v287
      %325 = vmatpush1.bf16.msra.mxu0 %v286
      %326 = vmatprep.subr.bf16.mxu0 %v285
      %327 = vmatpush1.bf16.msra.mxu0 %v284
      %328 = vmatprep.subr.bf16.mxu0 %v283
      %329 = vmatpush1.bf16.msra.mxu0 %v282
      %330 = vmatprep.subr.bf16.mxu0 0
      %331 = vmatpush2.bf16.msra.mxu0 0
      %332 = vmatprep.subr.bf16.mxu0 0
      %333 = vmatpush2.bf16.msra.mxu0 0
      %334 = vmatprep.subr.bf16.mxu0 0
      %335 = vmatpush2.bf16.msra.mxu0 0
      %336 = vmatprep.subr.bf16.mxu0 0
      %337 = vmatpush2.bf16.msra.mxu0 0
      %338 = vmatprep.subr.bf16.mxu0 0
      %339 = vmatpush2.bf16.msra.mxu0 0
      %340 = vmatprep.subr.bf16.mxu0 0
      %341 = vmatpush2.bf16.msra.mxu0 0
      %342 = vmatprep.subr.bf16.mxu0 0
      %343 = vmatpush2.bf16.msra.mxu0 0
      %344 = vmatprep.subr.bf16.mxu0 0
      %345 = vmatpush2.bf16.msra.mxu0 0
      %346 = vmatprep.mubr.bf16.mxu0 0
      %347 = vmatmul.mubr.bf16.gmra.mxu0 %v211
      %v348 = vpop.f32.mrf.mxu0
      %v349 = vadd.f32 %v232, %v348
      %v350 = vpop.f32.mrf.mxu0
      %v351 = vadd.f32 %v232, %v350
      %v352 = vpop.f32.mrf.mxu0
      %v353 = vpop.f32.mrf.mxu0
      %354 = vdwg.mxu0
      %vm355 = vcmp.gt.f32.partialorder %v349, 0.0
      %vm356 = vcmp.gt.f32.partialorder %v351, 0.0
      %v357 = vmin.f32 %v349, 0.0
      %v358 = vmin.f32 %v351, 0.0
      %v359 = vmul.f32 %v357, 1.442695
      %v360 = vpow.pop %v359
      %v361 = vmul.f32 %v358, 1.442695
      %v362 = vpow.pop %v361
      %v363 = vsub.f32 %v360, 1.0
      %v364 = vsub.f32 %v362, 1.0
      %v365 = vsel %vm355, %v349, %v363
      %v366 = vsel %vm356, %v351, %v364
      %v367 = vpack.c.bf16 %v365, %v365
      %v368 = vpack.c.bf16 %v366, %v366
      %v371 = vcombine.low %v367, %v368
      %v373 = vunpack.c.l.s4 1983009808
      %v374 = vunpack.c.0.s8 %v373
      %v375 = vlaneseq
      %v376 = vshrl.u32 %v375, 7
      %v377 = vsub.s32 %v374, %v376
      %v378 = vrot.slane %v371, %v377
      %380 = vst [vmem:[%s208] sm:$0xf] %v378
      %s381 = smul.u32 2, %s19
      %p382 = scmp.lt.s32.totalorder %s18, 1
      %s383 = scalar_select %p382, %s18, 1
      %p384 = scmp.lt.s32.totalorder %s381, 1
      %s385 = scalar_select %p384, %s381, 1
      %s386 = smul.addr %s383, 2
      %s387 = sadd.s32 %s385, %s386
      %s388 = smul.addr %s387, 2
      %s389 = scalar_lea.vmem %s3, %s388
      // Predicated region
      $region33: #{contextual_attention_forward.6} parent=31 // pred_check
        %p390 = pneg %p116
      $region34: #{contextual_attention_forward.6} parent=31 // pred_check_branch
        %392 = sbr.rel (%p390) target = $region36
      $region35: #{contextual_attention_forward.6} parent=31 // pred_region
        %s393 = smul.u32 2, %s19
      $region36: #{contextual_attention_forward.6} parent=31 // pred_fallthru
        _
    $region32: #{contextual_attention_forward.6} parent=5 // pred_fallthru
      _
    %p394 = scmp.le.s32.totalorder 2, %s9
    // Predicated region
    $region37: #{contextual_attention_forward.6} parent=5 // pred_check
      %p395 = pneg %p394
    $region38: #{contextual_attention_forward.6} parent=5 // pred_check_branch
      %397 = sbr.rel (%p395) target = $region40
    $region39: #{contextual_attention_forward.6} parent=5 // pred_region
      %s398 = ssub.s32 %s9, 2
      // Predicated region
      $region41: #{contextual_attention_forward.6} parent=39 // pred_check
        %p399 = pneg %p122
      $region42: #{contextual_attention_forward.6} parent=39 // pred_check_branch
        %401 = sbr.rel (%p399) target = $region44
      $region43: #{contextual_attention_forward.6} parent=39 // pred_region
        %s402 = smul.u32 2, %s21
        %p403 = scmp.lt.s32.totalorder %s20, 1
        %s404 = scalar_select %p403, %s20, 1
        %p405 = scmp.lt.s32.totalorder %s402, 1
        %s406 = scalar_select %p405, %s402, 1
        %s407 = smul.addr %s404, 2
        %s408 = sadd.s32 %s406, %s407
        %s409 = smul.addr %s408, 2
        %s410 = scalar_lea.vmem %s3, %s409
      $region44: #{contextual_attention_forward.6} parent=39 // pred_fallthru
        _
    $region40: #{contextual_attention_forward.6} parent=5 // pred_fallthru
      _
  $region6: #{contextual_attention_forward.6} parent=0 // loop_footer
    %s13 = sadd.s32 1, %s9
  $region7: #{contextual_attention_forward.6} parent=0 // loop_footer_branch
    %8 = sbr.rel target = $region3
  $region8: #{contextual_attention_forward.6} parent=0 // loop_exit
    _

// kernel: contextual_attention_forward.7
$region0: #{contextual_attention_forward.7}
  #allocation0 [shape = 'u32[]', space=smem, size = 0x4, offset = 0x4, fixed_abs, tag = 'smem constant byte address 0x4 - core index']
  #allocation1 [shape = 'u32[144,128]{1,0:T(1,128)}', space=vmem, size = 0x12000, scoped, tag = 'internal scratch']
  %s0 = inlined_call_operand.vmem [shape: bf16[4,128], index: 0, kind: input, shape index: {}]
  %s1 = inlined_call_operand.vmem [shape: bf16[2,128,256], index: 1, kind: input, shape index: {}]
  %s2 = inlined_call_operand.vmem [shape: f32[4,1], index: 2, kind: input, shape index: {}]
  %s3 = inlined_call_operand.vmem [shape: f32[2,4,256], index: 3, kind: output, shape index: {}]
  %s4 = sld [smem:[#allocation0]]
  $region45: #{contextual_attention_forward.7} parent=0
    _
  %s6 = ssub.s32 1, %s4
  %s7 = scalar_select 0, %s6, %s4
  loop: start=0, step=1, limit=4
  $region2: #{contextual_attention_forward.7} parent=0 // loop_pre_header
    _
  $region3: #{contextual_attention_forward.7} parent=0 // loop_header
    %s9 = sphi 0, %s13
    %p10 = scmp.ge.s32.totalorder %s9, 4
    %s16 = sphi 0, %s28
    %s17 = sphi 0, %s24
    %s18 = sphi 0, %s16
    %s19 = sphi 0, %s17
    %s20 = sphi 0, %s18
    %s21 = sphi 0, %s19
    %s29 = sphi 0, %s29
    %s31 = sphi 0, %s29
    %s32 = sphi 0, %s31
    %s46 = sphi 0, %s32
    %s54 = sphi 0, %s56
    %s57 = sphi 0, %s54
    %s58 = sphi 0, %s57
    %s74 = sphi 0, %s58
    %s78 = sphi 0, %s78
    %s80 = sphi 0, %s78
    %s81 = sphi 0, %s80
    %s95 = sphi 0, %s81
    %s103 = sphi 0, %s105
    %s106 = sphi 0, %s103
    %s107 = sphi 0, %s106
    %s123 = sphi 0, %s107
  $region4: #{contextual_attention_forward.7} parent=0 // loop_header_branch
    %12 = sbr.rel (%p10) target = $region8
  $region5: #{contextual_attention_forward.7} parent=0 // loop_body
    %s14 = ssub.s32 %s9, 1
    %s15 = ssub.s32 %s9, 2
    %s22 = sadd.s32 1, %s17
    %p23 = scmp.ge.s32.totalorder %s22, 1
    %s24 = scalar_select %p23, 0, %s22
    %s25 = sadd.s32 1, %s16
    %s26 = scalar_select %p23, %s25, %s16
    %p27 = scmp.ge.s32.totalorder %s26, 2
    %s28 = scalar_select %p27, 0, %s26
    %s30 = sadd.s32 %s29, 1
    %p33 = scmp.eq.s32.totalorder %s9, 1
    %p34 = scmp.ne.s32.totalorder %s29, %s31
    %p35 = scmp.eq.s32.totalorder %s9, 0
    %p36 = por %p34, %p35
    %p37 = scmp.ne.s32.totalorder %s29, %s31
    %p38 = scmp.eq.s32.totalorder %s14, 1
    %p39 = por %p37, %p38
    %p40 = scmp.ne.s32.totalorder %s31, %s32
    %p41 = scmp.eq.s32.totalorder %s14, 0
    %p42 = por %p40, %p41
    %p43 = scmp.ne.s32.totalorder %s31, %s32
    %p44 = scmp.eq.s32.totalorder %s15, 1
    %p45 = por %p43, %p44
    %p47 = scmp.ne.s32.totalorder %s32, %s46
    %p48 = scmp.eq.s32.totalorder %s15, 0
    %p49 = por %p47, %p48
    %s50 = ssub.s32 %s16, %s28
    %s51 = ssub.s32 %s17, %s24
    %s52 = sor.u32 %s50, %s51
    %p53 = scmp.eq.s32.totalorder %s52, 0
    %s55 = sadd.s32 %s54, 1
    %s56 = scalar_select %p53, %s54, %s55
    %p59 = pneg %p53
    %p60 = scmp.eq.s32.totalorder %s9, 1
    %p61 = por %p59, %p60
    %p62 = scmp.ne.s32.totalorder %s54, %s57
    %p63 = scmp.eq.s32.totalorder %s9, 0
    %p64 = por %p62, %p63
    %p65 = scmp.ne.s32.totalorder %s54, %s57
    %p66 = scmp.eq.s32.totalorder %s14, 1
    %p67 = por %p65, %p66
    %p68 = scmp.ne.s32.totalorder %s57, %s58
    %p69 = scmp.eq.s32.totalorder %s14, 0
    %p70 = por %p68, %p69
    %p71 = scmp.ne.s32.totalorder %s57, %s58
    %p72 = scmp.eq.s32.totalorder %s15, 1
    %p73 = por %p71, %p72
    %p75 = scmp.ne.s32.totalorder %s58, %s74
    %p76 = scmp.eq.s32.totalorder %s15, 0
    %p77 = por %p75, %p76
    %s79 = sadd.s32 %s78, 1
    %p82 = scmp.eq.s32.totalorder %s9, 1
    %p83 = scmp.ne.s32.totalorder %s78, %s80
    %p84 = scmp.eq.s32.totalorder %s9, 0
    %p85 = por %p83, %p84
    %p86 = scmp.ne.s32.totalorder %s78, %s80
    %p87 = scmp.eq.s32.totalorder %s14, 1
    %p88 = por %p86, %p87
    %p89 = scmp.ne.s32.totalorder %s80, %s81
    %p90 = scmp.eq.s32.totalorder %s14, 0
    %p91 = por %p89, %p90
    %p92 = scmp.ne.s32.totalorder %s80, %s81
    %p93 = scmp.eq.s32.totalorder %s15, 1
    %p94 = por %p92, %p93
    %p96 = scmp.ne.s32.totalorder %s81, %s95
    %p97 = scmp.eq.s32.totalorder %s15, 0
    %p98 = por %p96, %p97
    %s99 = ssub.s32 %s16, %s28
    %s100 = ssub.s32 %s17, %s24
    %s101 = sor.u32 %s99, %s100
    %p102 = scmp.eq.s32.totalorder %s101, 0
    %s104 = sadd.s32 %s103, 1
    %s105 = scalar_select %p102, %s103, %s104
    %p108 = pneg %p102
    %p109 = scmp.eq.s32.totalorder %s9, 1
    %p110 = por %p108, %p109
    %p111 = scmp.ne.s32.totalorder %s103, %s106
    %p112 = scmp.eq.s32.totalorder %s9, 0
    %p113 = por %p111, %p112
    %p114 = scmp.ne.s32.totalorder %s103, %s106
    %p115 = scmp.eq.s32.totalorder %s14, 1
    %p116 = por %p114, %p115
    %p117 = scmp.ne.s32.totalorder %s106, %s107
    %p118 = scmp.eq.s32.totalorder %s14, 0
    %p119 = por %p117, %p118
    %p120 = scmp.ne.s32.totalorder %s106, %s107
    %p121 = scmp.eq.s32.totalorder %s15, 1
    %p122 = por %p120, %p121
    %p124 = scmp.ne.s32.totalorder %s107, %s123
    %p125 = scmp.eq.s32.totalorder %s15, 0
    %p126 = por %p124, %p125
    %p127 = scmp.le.s32.totalorder 1, %s9
    %p128 = scmp.lt.s32.totalorder %s9, 3
    %p129 = pnand %p127, %p128
    %p130 = pneg %p129
    // Predicated region
    $region9: #{contextual_attention_forward.7} parent=5 // pred_check
      _
    $region10: #{contextual_attention_forward.7} parent=5 // pred_check_branch
      %132 = sbr.rel (%p129) target = $region12
    $region11: #{contextual_attention_forward.7} parent=5 // pred_region
      %s133 = ssub.s32 %s9, 1
      // Predicated region
      $region13: #{contextual_attention_forward.7} parent=11 // pred_check
        %p134 = pneg %p42
      $region14: #{contextual_attention_forward.7} parent=11 // pred_check_branch
        %136 = sbr.rel (%p134) target = $region16
      $region15: #{contextual_attention_forward.7} parent=11 // pred_region
        _
      $region16: #{contextual_attention_forward.7} parent=11 // pred_fallthru
        _
      // Predicated region
      $region17: #{contextual_attention_forward.7} parent=11 // pred_check
        %p137 = pneg %p91
      $region18: #{contextual_attention_forward.7} parent=11 // pred_check_branch
        %139 = sbr.rel (%p137) target = $region20
      $region19: #{contextual_attention_forward.7} parent=11 // pred_region
        _
      $region20: #{contextual_attention_forward.7} parent=11 // pred_fallthru
        _
    $region12: #{contextual_attention_forward.7} parent=5 // pred_fallthru
      _
    %p140 = scmp.lt.s32.totalorder %s9, 2
    // Predicated region
    $region21: #{contextual_attention_forward.7} parent=5 // pred_check
      %p141 = pneg %p140
    $region22: #{contextual_attention_forward.7} parent=5 // pred_check_branch
      %143 = sbr.rel (%p141) target = $region24
    $region23: #{contextual_attention_forward.7} parent=5 // pred_region
      // Predicated region
      $region25: #{contextual_attention_forward.7} parent=23 // pred_check
        %p144 = pneg %p64
      $region26: #{contextual_attention_forward.7} parent=23 // pred_check_branch
        %146 = sbr.rel (%p144) target = $region28
      $region27: #{contextual_attention_forward.7} parent=23 // pred_region
        %s147 = smul.u32 2, %s17
        %p148 = scmp.lt.s32.totalorder %s16, 1
        %s149 = scalar_select %p148, %s16, 1
        %p150 = scmp.lt.s32.totalorder %s147, 1
        %s151 = scalar_select %p150, %s147, 1
        %s152 = smul.addr %s149, 32
        %s153 = sadd.s32 %s151, %s152
        %s154 = smul.addr %s153, 4
        %s155 = scalar_lea.vmem %s1, %s154
        %s156 = smul.u32 2, %s17
      $region28: #{contextual_attention_forward.7} parent=23 // pred_fallthru
        _
    $region24: #{contextual_attention_forward.7} parent=5 // pred_fallthru
      _
    %p157 = scmp.le.s32.totalorder 1, %s9
    %p158 = scmp.lt.s32.totalorder %s9, 3
    %p159 = pnand %p157, %p158
    %p160 = pneg %p159
    // Predicated region
    $region29: #{contextual_attention_forward.7} parent=5 // pred_check
      _
    $region30: #{contextual_attention_forward.7} parent=5 // pred_check_branch
      %162 = sbr.rel (%p159) target = $region32
    $region31: #{contextual_attention_forward.7} parent=5 // pred_region
      %s163 = ssub.s32 %s9, 1
      %p164 = pneg %p42
      %p165 = pneg %p39
      %s166 = smul.u32 2, %s19
      %p167 = scmp.lt.s32.totalorder %s18, 1
      %s168 = scalar_select %p167, %s18, 1
      %p169 = scmp.lt.s32.totalorder %s166, 1
      %s170 = scalar_select %p169, %s166, 1
      %s171 = smul.addr %s168, 32
      %s172 = sadd.s32 %s170, %s171
      %s173 = smul.addr %s172, 4
      %s174 = scalar_lea.vmem %s1, %s173
      %p175 = pneg %p70
      %p176 = pneg %p67
      %p177 = pneg %p91
      %p178 = pneg %p88
      %p179 = pneg %p119
      %p180 = pneg %p116
      %s181 = smul.u32 2, %s19
      %p182 = scmp.lt.s32.totalorder %s18, 1
      %s183 = scalar_select %p182, %s18, 1
      %p184 = scmp.lt.s32.totalorder %s181, 1
      %s185 = scalar_select %p184, %s181, 1
      %s186 = smul.addr %s183, 2
      %s187 = sadd.s32 %s185, %s186
      %s188 = smul.addr %s187, 4
      %s189 = scalar_lea.vmem %s3, %s188
      %s190 = smul.u32 2, %s19
      %p191 = scmp.lt.s32.totalorder %s18, 1
      %s192 = scalar_select %p191, %s18, 1
      %p193 = scmp.lt.s32.totalorder %s190, 1
      %s194 = scalar_select %p193, %s190, 1
      %s195 = smul.addr %s192, 32
      %s196 = sadd.s32 %s194, %s195
      %s197 = smul.addr %s196, 4
      %s198 = scalar_lea.vmem %s1, %s197
      %s199 = smul.u32 2, %s19
      %s200 = smul.u32 2, %s19
      %p201 = scmp.lt.s32.totalorder %s18, 1
      %s202 = scalar_select %p201, %s18, 1
      %p203 = scmp.lt.s32.totalorder %s200, 1
      %s204 = scalar_select %p203, %s200, 1
      %s205 = smul.addr %s202, 2
      %s206 = sadd.s32 %s204, %s205
      %s207 = smul.addr %s206, 4
      %s208 = scalar_lea.vmem %s3, %s207
      %s209 = smul.u32 2, %s19
      %v211 = vld [vmem:[%s0] sm:$0x3]
      %v212 = vld [vmem:[%s198] sm:$0xff]
      %v213 = vld [vmem:[%s198 + $0x8] sm:$0xff]
      %v214 = vld [vmem:[%s198 + $0x10] sm:$0xff]
      %v215 = vld [vmem:[%s198 + $0x18] sm:$0xff]
      %v216 = vld [vmem:[%s198 + $0x20] sm:$0xff]
      %v217 = vld [vmem:[%s198 + $0x28] sm:$0xff]
      %v218 = vld [vmem:[%s198 + $0x30] sm:$0xff]
      %v219 = vld [vmem:[%s198 + $0x38] sm:$0xff]
      %v220 = vld [vmem:[%s198 + $0x40] sm:$0xff]
      %v221 = vld [vmem:[%s198 + $0x48] sm:$0xff]
      %v222 = vld [vmem:[%s198 + $0x50] sm:$0xff]
      %v223 = vld [vmem:[%s198 + $0x58] sm:$0xff]
      %v224 = vld [vmem:[%s198 + $0x60] sm:$0xff]
      %v225 = vld [vmem:[%s198 + $0x68] sm:$0xff]
      %v226 = vld [vmem:[%s198 + $0x70] sm:$0xff]
      %v227 = vld [vmem:[%s198 + $0x78] sm:$0xff]
      %v228 = vld [vmem:[%s2] sm:$0xf]
      %230 = vset.pattern.permute.xlu0 0
      %231 = vperm.xlu0 %230, %v228
      %v232 = vpop.permute.xlu0 %231
      %v250 = vunpack.c.l.b16 %v212
      %v251 = vunpack.c.h.b16 %v212
      %v252 = vunpack.c.l.b16 %v213
      %v253 = vunpack.c.h.b16 %v213
      %v254 = vunpack.c.l.b16 %v214
      %v255 = vunpack.c.h.b16 %v214
      %v256 = vunpack.c.l.b16 %v215
      %v257 = vunpack.c.h.b16 %v215
      %v258 = vunpack.c.l.b16 %v216
      %v259 = vunpack.c.h.b16 %v216
      %v260 = vunpack.c.l.b16 %v217
      %v261 = vunpack.c.h.b16 %v217
      %v262 = vunpack.c.l.b16 %v218
      %v263 = vunpack.c.h.b16 %v218
      %v264 = vunpack.c.l.b16 %v219
      %v265 = vunpack.c.h.b16 %v219
      %v266 = vunpack.c.l.b16 %v220
      %v267 = vunpack.c.h.b16 %v220
      %v268 = vunpack.c.l.b16 %v221
      %v269 = vunpack.c.h.b16 %v221
      %v270 = vunpack.c.l.b16 %v222
      %v271 = vunpack.c.h.b16 %v222
      %v272 = vunpack.c.l.b16 %v223
      %v273 = vunpack.c.h.b16 %v223
      %v274 = vunpack.c.l.b16 %v224
      %v275 = vunpack.c.h.b16 %v224
      %v276 = vunpack.c.l.b16 %v225
      %v277 = vunpack.c.h.b16 %v225
      %v278 = vunpack.c.l.b16 %v226
      %v279 = vunpack.c.h.b16 %v226
      %v280 = vunpack.c.l.b16 %v227
      %v281 = vunpack.c.h.b16 %v227
      %v282 = vpack.c.b16 %v252, %v250
      %v283 = vpack.c.b16 %v253, %v251
      %v284 = vpack.c.b16 %v256, %v254
      %v285 = vpack.c.b16 %v257, %v255
      %v286 = vpack.c.b16 %v260, %v258
      %v287 = vpack.c.b16 %v261, %v259
      %v288 = vpack.c.b16 %v264, %v262
      %v289 = vpack.c.b16 %v265, %v263
      %v290 = vpack.c.b16 %v268, %v266
      %v291 = vpack.c.b16 %v269, %v267
      %v292 = vpack.c.b16 %v272, %v270
      %v293 = vpack.c.b16 %v273, %v271
      %v294 = vpack.c.b16 %v276, %v274
      %v295 = vpack.c.b16 %v277, %v275
      %v296 = vpack.c.b16 %v280, %v278
      %v297 = vpack.c.b16 %v281, %v279
      %314 = vmatprep.subr.bf16.mxu0 %v297
      %315 = vmatpush1.bf16.msra.mxu0 %v296
      %316 = vmatprep.subr.bf16.mxu0 %v295
      %317 = vmatpush1.bf16.msra.mxu0 %v294
      %318 = vmatprep.subr.bf16.mxu0 %v293
      %319 = vmatpush1.bf16.msra.mxu0 %v292
      %320 = vmatprep.subr.bf16.mxu0 %v291
      %321 = vmatpush1.bf16.msra.mxu0 %v290
      %322 = vmatprep.subr.bf16.mxu0 %v289
      %323 = vmatpush1.bf16.msra.mxu0 %v288
      %324 = vmatprep.subr.bf16.mxu0 %v287
      %325 = vmatpush1.bf16.msra.mxu0 %v286
      %326 = vmatprep.subr.bf16.mxu0 %v285
      %327 = vmatpush1.bf16.msra.mxu0 %v284
      %328 = vmatprep.subr.bf16.mxu0 %v283
      %329 = vmatpush1.bf16.msra.mxu0 %v282
      %330 = vmatprep.subr.bf16.mxu0 0
      %331 = vmatpush2.bf16.msra.mxu0 0
      %332 = vmatprep.subr.bf16.mxu0 0
      %333 = vmatpush2.bf16.msra.mxu0 0
      %334 = vmatprep.subr.bf16.mxu0 0
      %335 = vmatpush2.bf16.msra.mxu0 0
      %336 = vmatprep.subr.bf16.mxu0 0
      %337 = vmatpush2.bf16.msra.mxu0 0
      %338 = vmatprep.subr.bf16.mxu0 0
      %339 = vmatpush2.bf16.msra.mxu0 0
      %340 = vmatprep.subr.bf16.mxu0 0
      %341 = vmatpush2.bf16.msra.mxu0 0
      %342 = vmatprep.subr.bf16.mxu0 0
      %343 = vmatpush2.bf16.msra.mxu0 0
      %344 = vmatprep.subr.bf16.mxu0 0
      %345 = vmatpush2.bf16.msra.mxu0 0
      %346 = vmatprep.mubr.bf16.mxu0 0
      %347 = vmatmul.mubr.bf16.gmra.mxu0 %v211
      %v348 = vpop.f32.mrf.mxu0
      %v349 = vadd.f32 %v232, %v348
      %v350 = vpop.f32.mrf.mxu0
      %v351 = vadd.f32 %v232, %v350
      %v352 = vpop.f32.mrf.mxu0
      %v353 = vpop.f32.mrf.mxu0
      %354 = vdwg.mxu0
      %vm355 = vcmp.gt.f32.partialorder %v349, 0.0
      %vm356 = vcmp.gt.f32.partialorder %v351, 0.0
      %v357 = vmin.f32 %v349, 0.0
      %v358 = vmin.f32 %v351, 0.0
      %v359 = vmul.f32 %v357, 1.442695
      %v360 = vpow.pop %v359
      %v361 = vmul.f32 %v358, 1.442695
      %v362 = vpow.pop %v361
      %v363 = vsub.f32 %v360, 1.0
      %v364 = vsub.f32 %v362, 1.0
      %v365 = vsel %vm355, %v349, %v363
      %v366 = vsel %vm356, %v351, %v364
      %v369 = vcombine.low %v365, %v366
      %371 = vst [vmem:[%s208] sm:$0xff] %v369
      %s372 = smul.u32 2, %s19
      %p373 = scmp.lt.s32.totalorder %s18, 1
      %s374 = scalar_select %p373, %s18, 1
      %p375 = scmp.lt.s32.totalorder %s372, 1
      %s376 = scalar_select %p375, %s372, 1
      %s377 = smul.addr %s374, 2
      %s378 = sadd.s32 %s376, %s377
      %s379 = smul.addr %s378, 4
      %s380 = scalar_lea.vmem %s3, %s379
      // Predicated region
      $region33: #{contextual_attention_forward.7} parent=31 // pred_check
        %p381 = pneg %p116
      $region34: #{contextual_attention_forward.7} parent=31 // pred_check_branch
        %383 = sbr.rel (%p381) target = $region36
      $region35: #{contextual_attention_forward.7} parent=31 // pred_region
        %s384 = smul.u32 2, %s19
      $region36: #{contextual_attention_forward.7} parent=31 // pred_fallthru
        _
    $region32: #{contextual_attention_forward.7} parent=5 // pred_fallthru
      _
    %p385 = scmp.le.s32.totalorder 2, %s9
    // Predicated region
    $region37: #{contextual_attention_forward.7} parent=5 // pred_check
      %p386 = pneg %p385
    $region38: #{contextual_attention_forward.7} parent=5 // pred_check_branch
      %388 = sbr.rel (%p386) target = $region40
    $region39: #{contextual_attention_forward.7} parent=5 // pred_region
      %s389 = ssub.s32 %s9, 2
      // Predicated region
      $region41: #{contextual_attention_forward.7} parent=39 // pred_check
        %p390 = pneg %p122
      $region42: #{contextual_attention_forward.7} parent=39 // pred_check_branch
        %392 = sbr.rel (%p390) target = $region44
      $region43: #{contextual_attention_forward.7} parent=39 // pred_region
        %s393 = smul.u32 2, %s21
        %p394 = scmp.lt.s32.totalorder %s20, 1
        %s395 = scalar_select %p394, %s20, 1
        %p396 = scmp.lt.s32.totalorder %s393, 1
        %s397 = scalar_select %p396, %s393, 1
        %s398 = smul.addr %s395, 2
        %s399 = sadd.s32 %s397, %s398
        %s400 = smul.addr %s399, 4
        %s401 = scalar_lea.vmem %s3, %s400
      $region44: #{contextual_attention_forward.7} parent=39 // pred_fallthru
        _
    $region40: #{contextual_attention_forward.7} parent=5 // pred_fallthru
      _
  $region6: #{contextual_attention_forward.7} parent=0 // loop_footer
    %s13 = sadd.s32 1, %s9
  $region7: #{contextual_attention_forward.7} parent=0 // loop_footer_branch
    %8 = sbr.rel target = $region3
  $region8: #{contextual_attention_forward.7} parent=0 // loop_exit
    _

</llo_original>
